<compile_context>
chip_gen: v6e
topology: v6e:2x2x1
jax: 0.10.0
libtpu: 0.0.40
codegen_flags: <defaults>
</compile_context>

<pallas_src>
import functools

import jax
import jax.numpy as jnp
from jax import lax
from jax.experimental import pallas as pl
from jax.experimental.pallas import tpu as pltpu


def _round_up(x: int, m: int) -> int:
    return ((x + m - 1) // m) * m


def _pick_batch_block(B: int, n_pad: int, max_rows: int = 1024) -> int:
    """Smallest divisor Bt of B with Bt*n_pad >= 256 (fills the 256-row MXU on
    v6e/v7x), capped at max_rows per step; falls back to the largest divisor
    under the cap when 256 rows are unreachable."""
    best = 1
    for bt in range(1, B + 1):
        if B % bt != 0 or bt * n_pad > max_rows:
            continue
        best = bt
        if bt * n_pad >= 256:
            return bt
    return best


def prepare_mhsa_params(wq, wk, wv, wo, bo, *, n_head: int):
    """One-time (offline) parameter prep.

    Weights are expected pre-transposed to (E_in, E_out) = nn.Linear.weight.T.
    Folds the 1/sqrt(head_dim) attention scale into Wq so the kernel never
    multiplies q by the scale.
    """
    emb = wq.shape[0]
    head_dim = emb // n_head
    scale = 1.0 / (head_dim ** 0.5)
    return (wq * jnp.asarray(scale, wq.dtype), wk, wv, wo, bo)


def mhsa_kernel(x_ref, wq_ref, wk_ref, wv_ref, wo_ref, bo_ref, o_ref, y_ref, *,
                batch_block: int, n_pad: int, n_valid: int, n_head: int,
                head_dim: int):
    """One grid step == one block of `batch_block` sequences.

    x_ref   : (Bt, Np, E) VMEM input block
    wq/wk/wv: (E, E)      VMEM, resident for the whole grid (constant index_map)
    wo_ref  : (E, E)      VMEM, resident
    bo_ref  : (1, E)      VMEM, resident
    o_ref   : (Bt, Np, E) output block
    y_ref   : (Bt*Np, E)  VMEM scratch holding the concatenated per-head outputs
    """
    dt = x_ref.dtype
    emb = x_ref.shape[-1]
    m = batch_block * n_pad

    # Merge batch/sequence dims (Np is a multiple of 8 -> layout-preserving).
    x2d = x_ref[...].reshape(m, emb)

    # Fused QKV projections over all Bt*Np rows (full-E MXU tiles, f32 accum).
    # The 1/sqrt(head_dim) scale is already folded into wq.
    q = jnp.dot(x2d, wq_ref[...], preferred_element_type=jnp.float32).astype(dt)
    k = jnp.dot(x2d, wk_ref[...], preferred_element_type=jnp.float32).astype(dt)
    v = jnp.dot(x2d, wv_ref[...], preferred_element_type=jnp.float32).astype(dt)

    # Key-padding mask, built once and hoisted out of the head loop.
    if n_valid < n_pad:
        key_ok = lax.broadcasted_iota(jnp.int32, (n_pad, n_pad), 1) < n_valid

    # Per-(sequence, head) attention with static slices; results land directly
    # in the (Bt*Np, E) scratch so the output projection below is one fused
    # full-contraction-depth matmul.
    for b in range(batch_block):
        r0 = b * n_pad
        for h in range(n_head):
            c0 = h * head_dim
            qh = q[r0:r0 + n_pad, c0:c0 + head_dim]
            kh = k[r0:r0 + n_pad, c0:c0 + head_dim]
            vh = v[r0:r0 + n_pad, c0:c0 + head_dim]

            # (Np, Np) scores; contract dim 1 of both operands (no kh.T).
            s = lax.dot_general(qh, kh, (((1,), (1,)), ((), ())),
                                preferred_element_type=jnp.float32)
            if n_valid < n_pad:
                s = jnp.where(key_ok, s, -1e30)
            s = s - jnp.max(s, axis=-1, keepdims=True)
            p = jnp.exp(s)
            p = (p * pl.reciprocal(jnp.sum(p, axis=-1, keepdims=True),
                                   approx=True)).astype(dt)

            y_ref[r0:r0 + n_pad, c0:c0 + head_dim] = jnp.dot(
                p, vh, preferred_element_type=jnp.float32).astype(dt)

    # Fused output projection: one (Bt*Np, E) @ (E, E) matmul + bias.
    out = jnp.dot(y_ref[...], wo_ref[...], preferred_element_type=jnp.float32)
    out = out + bo_ref[...].astype(jnp.float32)
    o_ref[...] = out.reshape(batch_block, n_pad, emb).astype(o_ref.dtype)


def mhsa_forward(x, wq, wk, wv, wo, bo, *, n_head: int, batch_block=None):
    """x: (B, N, E).  Parameters from prepare_mhsa_params (Wq pre-scaled)."""
    B, N, E = x.shape
    assert E % n_head == 0
    head_dim = E // n_head

    # Pad num_patch so (N, E) / (N, N) tiles are sublane/lane friendly
    # (e.g. ViT-B/16: 197 -> 256).  Padded keys are masked inside the kernel;
    # padded query rows are dropped below.
    n_pad = _round_up(N, 128) if N >= 128 else _round_up(N, 8)
    x_in = jnp.pad(x, ((0, 0), (0, n_pad - N), (0, 0))) if n_pad != N else x

    if batch_block is None:
        batch_block = _pick_batch_block(B, n_pad)
    assert B % batch_block == 0
    grid_b = B // batch_block
    m = batch_block * n_pad

    kernel = functools.partial(
        mhsa_kernel, batch_block=batch_block, n_pad=n_pad, n_valid=N,
        n_head=n_head, head_dim=head_dim)

    # VMEM footprint estimate: double-buffered x/out blocks, resident weights
    # (counted twice for safety), y scratch, f32 q/k/v temporaries, and one
    # f32 (Np, Np) score/prob pair.  Cap at 56 MiB for v7x's 64 MiB VMEM.
    itemsize = jnp.dtype(x.dtype).itemsize
    est = (2 * 2 * m * E * itemsize
           + 2 * 4 * E * E * itemsize
           + m * E * itemsize
           + 3 * m * E * 4
           + 2 * n_pad * n_pad * 4)
    vmem_limit = int(min(max(est * 3 // 2, 32 * 1024 * 1024),
                         56 * 1024 * 1024))

    out = pl.pallas_call(
        kernel,
        out_shape=jax.ShapeDtypeStruct((B, n_pad, E), x.dtype),
        grid_spec=pltpu.PrefetchScalarGridSpec(
            num_scalar_prefetch=0,
            grid=(grid_b,),
            in_specs=[
                pl.BlockSpec((batch_block, n_pad, E), lambda b: (b, 0, 0)),  # x
                pl.BlockSpec((E, E), lambda b: (0, 0)),   # Wq (VMEM-resident)
                pl.BlockSpec((E, E), lambda b: (0, 0)),   # Wk (VMEM-resident)
                pl.BlockSpec((E, E), lambda b: (0, 0)),   # Wv (VMEM-resident)
                pl.BlockSpec((E, E), lambda b: (0, 0)),   # Wo (VMEM-resident)
                pl.BlockSpec((1, E), lambda b: (0, 0)),   # bias (VMEM-resident)
            ],
            out_specs=pl.BlockSpec((batch_block, n_pad, E), lambda b: (b, 0, 0)),
            scratch_shapes=[pltpu.VMEM((m, E), x.dtype)],  # concat-of-heads y
        ),
        compiler_params=pltpu.CompilerParams(
            dimension_semantics=("parallel",),
            vmem_limit_bytes=vmem_limit,
        ),
    )(x_in, wq, wk, wv, wo, bo)

    return out[:, :N, :] if n_pad != N else out


def mhsa_reference(x, wq, wk, wv, wo, bo, *, n_head: int):
    """Pure-JAX reference mirroring the PyTorch forward (eval mode), in f32.

    Takes UNSCALED Wq (it applies / sqrt(head_dim) itself, like the module)."""
    B, N, E = x.shape
    D = E // n_head
    x, wq, wk, wv, wo, bo = (a.astype(jnp.float32) for a in (x, wq, wk, wv, wo, bo))
    q = (x @ wq).reshape(B, N, n_head, D).transpose(0, 2, 1, 3)
    k = (x @ wk).reshape(B, N, n_head, D).transpose(0, 2, 1, 3)
    v = (x @ wv).reshape(B, N, n_head, D).transpose(0, 2, 1, 3)
    dots = jnp.einsum('bhid,bhjd->bhij', q, k) / (D ** 0.5)
    attn = jax.nn.softmax(dots, axis=-1)
    y = jnp.einsum('bhij,bhjd->bhid', attn, v)
    y = y.transpose(0, 2, 1, 3).reshape(B, N, E)
    return y @ wo + bo


if __name__ == "__main__":
    # Small shapes consistent with the module's forward: x is (B, N, E).
    # head_dim = 128 so per-head lane slices are tile-aligned.
    B, N, E, H = 2, 16, 256, 2
    dropout = 0.1  # identity in eval mode

    key = jax.random.PRNGKey(0)
    kx, kq, kk, kv, kw, kb = jax.random.split(key, 6)

    x = jax.random.normal(kx, (B, N, E), dtype=jnp.float32)

    # Deterministic parameter init (nn.Linear shapes), stored transposed -> (E_in, E_out).
    s = 1.0 / (E ** 0.5)
    wq = jax.random.uniform(kq, (E, E), jnp.float32, -s, s)
    wk = jax.random.uniform(kk, (E, E), jnp.float32, -s, s)
    wv = jax.random.uniform(kv, (E, E), jnp.float32, -s, s)
    wo = jax.random.uniform(kw, (E, E), jnp.float32, -s, s)
    bo = jax.random.uniform(kb, (1, E), jnp.float32, -s, s)

    ref = mhsa_reference(x, wq, wk, wv, wo, bo, n_head=H)

    # One-time weight prep: fold 1/sqrt(head_dim) into Wq.
    pq, pk, pv, po, pb = prepare_mhsa_params(wq, wk, wv, wo, bo, n_head=H)

    # f32 path.
    out = mhsa_forward(x, pq, pk, pv, po, pb, n_head=H)
    out = jax.block_until_ready(out)
    assert out.shape == (B, N, E)
    assert jnp.max(jnp.abs(out - ref)) < 1e-2, "f32 kernel mismatch vs reference"

    # Padded path: N not a multiple of 8 exercises the pad + key-mask code.
    Np = 12
    xp = x[:, :Np, :]
    refp = mhsa_reference(xp, wq, wk, wv, wo, bo, n_head=H)
    outp = jax.block_until_ready(mhsa_forward(xp, pq, pk, pv, po, pb, n_head=H))
    assert outp.shape == (B, Np, E)
    assert jnp.max(jnp.abs(outp - refp)) < 1e-2, "padded-N kernel mismatch vs reference"

    # bf16 path (native-dtype matmuls with f32 accumulation) -- loose sanity check.
    out_bf = mhsa_forward(x.astype(jnp.bfloat16), pq.astype(jnp.bfloat16),
                          pk.astype(jnp.bfloat16), pv.astype(jnp.bfloat16),
                          po.astype(jnp.bfloat16), pb.astype(jnp.bfloat16),
                          n_head=H)
    out_bf = jax.block_until_ready(out_bf).astype(jnp.float32)
    rel = jnp.max(jnp.abs(out_bf - ref)) / (jnp.max(jnp.abs(ref)) + 1e-6)
    assert bool(jnp.isfinite(rel)) and rel < 1e-1, "bf16 kernel mismatch vs reference"

    print("KERNEL_OK")
</pallas_src>

<mosaic_0001>
module attributes {stable_mosaic.version = 11 : i64} {
  func.func @mhsa_kernel(%arg0: i32, %arg1: memref<2x16x256xf32, #tpu.memory_space<vmem>>, %arg2: memref<256x256xf32, #tpu.memory_space<vmem>>, %arg3: memref<256x256xf32, #tpu.memory_space<vmem>>, %arg4: memref<256x256xf32, #tpu.memory_space<vmem>>, %arg5: memref<256x256xf32, #tpu.memory_space<vmem>>, %arg6: memref<1x256xf32, #tpu.memory_space<vmem>>, %arg7: memref<2x16x256xf32, #tpu.memory_space<vmem>>, %arg8: memref<32x256xf32, #tpu.memory_space<vmem>>) attributes {dimension_semantics = [#tpu.dimension_semantics<parallel>], iteration_bounds = array<i64: 1>, scalar_prefetch = 0 : i64, scratch_operands = 1 : i64, tpu.core_type = #tpu.core_type<tc>, window_params = [{transform_indices = @transform_0, window_bounds = array<i64: 2, 16, 256>}, {pipeline_mode = #tpu.pipeline_mode<synchronous>, transform_indices = @transform_1, window_bounds = array<i64: 256, 256>}, {pipeline_mode = #tpu.pipeline_mode<synchronous>, transform_indices = @transform_2, window_bounds = array<i64: 256, 256>}, {pipeline_mode = #tpu.pipeline_mode<synchronous>, transform_indices = @transform_3, window_bounds = array<i64: 256, 256>}, {pipeline_mode = #tpu.pipeline_mode<synchronous>, transform_indices = @transform_4, window_bounds = array<i64: 256, 256>}, {pipeline_mode = #tpu.pipeline_mode<synchronous>, transform_indices = @transform_5, window_bounds = array<i64: 1, 256>}, {transform_indices = @transform_6, window_bounds = array<i64: 2, 16, 256>}]} {
    %c0 = arith.constant 0 : index
    %c0_0 = arith.constant 0 : index
    %c0_1 = arith.constant 0 : index
    %0 = vector.load %arg1[%c0, %c0_0, %c0_1] : memref<2x16x256xf32, #tpu.memory_space<vmem>>, vector<2x16x256xf32>
    %1 = vector.shape_cast %0 : vector<2x16x256xf32> to vector<32x256xf32>
    %c0_2 = arith.constant 0 : index
    %c0_3 = arith.constant 0 : index
    %2 = vector.load %arg2[%c0_2, %c0_3] : memref<256x256xf32, #tpu.memory_space<vmem>>, vector<256x256xf32>
    %cst = arith.constant dense<0.000000e+00> : vector<32x256xf32>
    %3 = tpu.matmul %1, %2, %cst {dimension_numbers = #tpu.dot_dimension_numbers<[1], [0], [0], [1], [0, 0, 1, 1], [], []>} : vector<32x256xf32>, vector<256x256xf32>, vector<32x256xf32> -> vector<32x256xf32>
    %c0_4 = arith.constant 0 : index
    %c0_5 = arith.constant 0 : index
    %4 = vector.load %arg3[%c0_4, %c0_5] : memref<256x256xf32, #tpu.memory_space<vmem>>, vector<256x256xf32>
    %cst_6 = arith.constant dense<0.000000e+00> : vector<32x256xf32>
    %5 = tpu.matmul %1, %4, %cst_6 {dimension_numbers = #tpu.dot_dimension_numbers<[1], [0], [0], [1], [0, 0, 1, 1], [], []>} : vector<32x256xf32>, vector<256x256xf32>, vector<32x256xf32> -> vector<32x256xf32>
    %c0_7 = arith.constant 0 : index
    %c0_8 = arith.constant 0 : index
    %6 = vector.load %arg4[%c0_7, %c0_8] : memref<256x256xf32, #tpu.memory_space<vmem>>, vector<256x256xf32>
    %cst_9 = arith.constant dense<0.000000e+00> : vector<32x256xf32>
    %7 = tpu.matmul %1, %6, %cst_9 {dimension_numbers = #tpu.dot_dimension_numbers<[1], [0], [0], [1], [0, 0, 1, 1], [], []>} : vector<32x256xf32>, vector<256x256xf32>, vector<32x256xf32> -> vector<32x256xf32>
    %8 = vector.extract_strided_slice %3 {offsets = [0, 0], sizes = [16, 128], strides = [1, 1]} : vector<32x256xf32> to vector<16x128xf32>
    %9 = vector.extract_strided_slice %5 {offsets = [0, 0], sizes = [16, 128], strides = [1, 1]} : vector<32x256xf32> to vector<16x128xf32>
    %10 = vector.extract_strided_slice %7 {offsets = [0, 0], sizes = [16, 128], strides = [1, 1]} : vector<32x256xf32> to vector<16x128xf32>
    %cst_10 = arith.constant dense<0.000000e+00> : vector<16x16xf32>
    %11 = tpu.matmul %8, %9, %cst_10 {dimension_numbers = #tpu.dot_dimension_numbers<[1], [1], [0], [0], [0, 0, 1, 0], [], []>} : vector<16x128xf32>, vector<16x128xf32>, vector<16x16xf32> -> vector<16x16xf32>
    %cst_11 = arith.constant dense<0xFF800000> : vector<16xf32>
    %12 = vector.multi_reduction <maximumf>, %11, %cst_11 [1] : vector<16x16xf32> to vector<16xf32>
    %13 = vector.shape_cast %12 : vector<16xf32> to vector<16x1xf32>
    %14 = vector.broadcast %13 : vector<16x1xf32> to vector<16x16xf32>
    %15 = arith.subf %11, %14 : vector<16x16xf32>
    %16 = math.exp %15 : vector<16x16xf32>
    %cst_12 = arith.constant dense<0.000000e+00> : vector<16xf32>
    %17 = vector.multi_reduction <add>, %16, %cst_12 [1] : vector<16x16xf32> to vector<16xf32>
    %18 = vector.shape_cast %17 : vector<16xf32> to vector<16x1xf32>
    %19 = tpu.reciprocal %18 {approx = true} : vector<16x1xf32> -> vector<16x1xf32>
    %20 = vector.broadcast %19 : vector<16x1xf32> to vector<16x16xf32>
    %21 = arith.mulf %16, %20 : vector<16x16xf32>
    %cst_13 = arith.constant dense<0.000000e+00> : vector<16x128xf32>
    %22 = tpu.matmul %21, %10, %cst_13 {dimension_numbers = #tpu.dot_dimension_numbers<[1], [0], [0], [1], [0, 0, 1, 1], [], []>} : vector<16x16xf32>, vector<16x128xf32>, vector<16x128xf32> -> vector<16x128xf32>
    %c0_14 = arith.constant 0 : index
    %c0_15 = arith.constant 0 : index
    %23 = vector.load %arg8[%c0_14, %c0_15] : memref<32x256xf32, #tpu.memory_space<vmem>>, vector<16x128xf32>
    tpu.vector_store %arg8[%c0_14, %c0_15], %22 {strides = array<i32>} : memref<32x256xf32, #tpu.memory_space<vmem>>, vector<16x128xf32>,
    %24 = vector.extract_strided_slice %3 {offsets = [0, 128], sizes = [16, 128], strides = [1, 1]} : vector<32x256xf32> to vector<16x128xf32>
    %25 = vector.extract_strided_slice %5 {offsets = [0, 128], sizes = [16, 128], strides = [1, 1]} : vector<32x256xf32> to vector<16x128xf32>
    %26 = vector.extract_strided_slice %7 {offsets = [0, 128], sizes = [16, 128], strides = [1, 1]} : vector<32x256xf32> to vector<16x128xf32>
    %cst_16 = arith.constant dense<0.000000e+00> : vector<16x16xf32>
    %27 = tpu.matmul %24, %25, %cst_16 {dimension_numbers = #tpu.dot_dimension_numbers<[1], [1], [0], [0], [0, 0, 1, 0], [], []>} : vector<16x128xf32>, vector<16x128xf32>, vector<16x16xf32> -> vector<16x16xf32>
    %cst_17 = arith.constant dense<0xFF800000> : vector<16xf32>
    %28 = vector.multi_reduction <maximumf>, %27, %cst_17 [1] : vector<16x16xf32> to vector<16xf32>
    %29 = vector.shape_cast %28 : vector<16xf32> to vector<16x1xf32>
    %30 = vector.broadcast %29 : vector<16x1xf32> to vector<16x16xf32>
    %31 = arith.subf %27, %30 : vector<16x16xf32>
    %32 = math.exp %31 : vector<16x16xf32>
    %cst_18 = arith.constant dense<0.000000e+00> : vector<16xf32>
    %33 = vector.multi_reduction <add>, %32, %cst_18 [1] : vector<16x16xf32> to vector<16xf32>
    %34 = vector.shape_cast %33 : vector<16xf32> to vector<16x1xf32>
    %35 = tpu.reciprocal %34 {approx = true} : vector<16x1xf32> -> vector<16x1xf32>
    %36 = vector.broadcast %35 : vector<16x1xf32> to vector<16x16xf32>
    %37 = arith.mulf %32, %36 : vector<16x16xf32>
    %cst_19 = arith.constant dense<0.000000e+00> : vector<16x128xf32>
    %38 = tpu.matmul %37, %26, %cst_19 {dimension_numbers = #tpu.dot_dimension_numbers<[1], [0], [0], [1], [0, 0, 1, 1], [], []>} : vector<16x16xf32>, vector<16x128xf32>, vector<16x128xf32> -> vector<16x128xf32>
    %c0_20 = arith.constant 0 : index
    %c128 = arith.constant 128 : index
    %39 = vector.load %arg8[%c0_20, %c128] : memref<32x256xf32, #tpu.memory_space<vmem>>, vector<16x128xf32>
    tpu.vector_store %arg8[%c0_20, %c128], %38 {strides = array<i32>} : memref<32x256xf32, #tpu.memory_space<vmem>>, vector<16x128xf32>,
    %40 = vector.extract_strided_slice %3 {offsets = [16, 0], sizes = [16, 128], strides = [1, 1]} : vector<32x256xf32> to vector<16x128xf32>
    %41 = vector.extract_strided_slice %5 {offsets = [16, 0], sizes = [16, 128], strides = [1, 1]} : vector<32x256xf32> to vector<16x128xf32>
    %42 = vector.extract_strided_slice %7 {offsets = [16, 0], sizes = [16, 128], strides = [1, 1]} : vector<32x256xf32> to vector<16x128xf32>
    %cst_21 = arith.constant dense<0.000000e+00> : vector<16x16xf32>
    %43 = tpu.matmul %40, %41, %cst_21 {dimension_numbers = #tpu.dot_dimension_numbers<[1], [1], [0], [0], [0, 0, 1, 0], [], []>} : vector<16x128xf32>, vector<16x128xf32>, vector<16x16xf32> -> vector<16x16xf32>
    %cst_22 = arith.constant dense<0xFF800000> : vector<16xf32>
    %44 = vector.multi_reduction <maximumf>, %43, %cst_22 [1] : vector<16x16xf32> to vector<16xf32>
    %45 = vector.shape_cast %44 : vector<16xf32> to vector<16x1xf32>
    %46 = vector.broadcast %45 : vector<16x1xf32> to vector<16x16xf32>
    %47 = arith.subf %43, %46 : vector<16x16xf32>
    %48 = math.exp %47 : vector<16x16xf32>
    %cst_23 = arith.constant dense<0.000000e+00> : vector<16xf32>
    %49 = vector.multi_reduction <add>, %48, %cst_23 [1] : vector<16x16xf32> to vector<16xf32>
    %50 = vector.shape_cast %49 : vector<16xf32> to vector<16x1xf32>
    %51 = tpu.reciprocal %50 {approx = true} : vector<16x1xf32> -> vector<16x1xf32>
    %52 = vector.broadcast %51 : vector<16x1xf32> to vector<16x16xf32>
    %53 = arith.mulf %48, %52 : vector<16x16xf32>
    %cst_24 = arith.constant dense<0.000000e+00> : vector<16x128xf32>
    %54 = tpu.matmul %53, %42, %cst_24 {dimension_numbers = #tpu.dot_dimension_numbers<[1], [0], [0], [1], [0, 0, 1, 1], [], []>} : vector<16x16xf32>, vector<16x128xf32>, vector<16x128xf32> -> vector<16x128xf32>
    %c16 = arith.constant 16 : index
    %c0_25 = arith.constant 0 : index
    %55 = vector.load %arg8[%c16, %c0_25] : memref<32x256xf32, #tpu.memory_space<vmem>>, vector<16x128xf32>
    tpu.vector_store %arg8[%c16, %c0_25], %54 {strides = array<i32>} : memref<32x256xf32, #tpu.memory_space<vmem>>, vector<16x128xf32>,
    %56 = vector.extract_strided_slice %3 {offsets = [16, 128], sizes = [16, 128], strides = [1, 1]} : vector<32x256xf32> to vector<16x128xf32>
    %57 = vector.extract_strided_slice %5 {offsets = [16, 128], sizes = [16, 128], strides = [1, 1]} : vector<32x256xf32> to vector<16x128xf32>
    %58 = vector.extract_strided_slice %7 {offsets = [16, 128], sizes = [16, 128], strides = [1, 1]} : vector<32x256xf32> to vector<16x128xf32>
    %cst_26 = arith.constant dense<0.000000e+00> : vector<16x16xf32>
    %59 = tpu.matmul %56, %57, %cst_26 {dimension_numbers = #tpu.dot_dimension_numbers<[1], [1], [0], [0], [0, 0, 1, 0], [], []>} : vector<16x128xf32>, vector<16x128xf32>, vector<16x16xf32> -> vector<16x16xf32>
    %cst_27 = arith.constant dense<0xFF800000> : vector<16xf32>
    %60 = vector.multi_reduction <maximumf>, %59, %cst_27 [1] : vector<16x16xf32> to vector<16xf32>
    %61 = vector.shape_cast %60 : vector<16xf32> to vector<16x1xf32>
    %62 = vector.broadcast %61 : vector<16x1xf32> to vector<16x16xf32>
    %63 = arith.subf %59, %62 : vector<16x16xf32>
    %64 = math.exp %63 : vector<16x16xf32>
    %cst_28 = arith.constant dense<0.000000e+00> : vector<16xf32>
    %65 = vector.multi_reduction <add>, %64, %cst_28 [1] : vector<16x16xf32> to vector<16xf32>
    %66 = vector.shape_cast %65 : vector<16xf32> to vector<16x1xf32>
    %67 = tpu.reciprocal %66 {approx = true} : vector<16x1xf32> -> vector<16x1xf32>
    %68 = vector.broadcast %67 : vector<16x1xf32> to vector<16x16xf32>
    %69 = arith.mulf %64, %68 : vector<16x16xf32>
    %cst_29 = arith.constant dense<0.000000e+00> : vector<16x128xf32>
    %70 = tpu.matmul %69, %58, %cst_29 {dimension_numbers = #tpu.dot_dimension_numbers<[1], [0], [0], [1], [0, 0, 1, 1], [], []>} : vector<16x16xf32>, vector<16x128xf32>, vector<16x128xf32> -> vector<16x128xf32>
    %c16_30 = arith.constant 16 : index
    %c128_31 = arith.constant 128 : index
    %71 = vector.load %arg8[%c16_30, %c128_31] : memref<32x256xf32, #tpu.memory_space<vmem>>, vector<16x128xf32>
    tpu.vector_store %arg8[%c16_30, %c128_31], %70 {strides = array<i32>} : memref<32x256xf32, #tpu.memory_space<vmem>>, vector<16x128xf32>,
    %c0_32 = arith.constant 0 : index
    %c0_33 = arith.constant 0 : index
    %72 = vector.load %arg8[%c0_32, %c0_33] : memref<32x256xf32, #tpu.memory_space<vmem>>, vector<32x256xf32>
    %c0_34 = arith.constant 0 : index
    %c0_35 = arith.constant 0 : index
    %73 = vector.load %arg5[%c0_34, %c0_35] : memref<256x256xf32, #tpu.memory_space<vmem>>, vector<256x256xf32>
    %cst_36 = arith.constant dense<0.000000e+00> : vector<32x256xf32>
    %74 = tpu.matmul %72, %73, %cst_36 {dimension_numbers = #tpu.dot_dimension_numbers<[1], [0], [0], [1], [0, 0, 1, 1], [], []>} : vector<32x256xf32>, vector<256x256xf32>, vector<32x256xf32> -> vector<32x256xf32>
    %c0_37 = arith.constant 0 : index
    %c0_38 = arith.constant 0 : index
    %75 = vector.load %arg6[%c0_37, %c0_38] : memref<1x256xf32, #tpu.memory_space<vmem>>, vector<1x256xf32>
    %76 = vector.broadcast %75 : vector<1x256xf32> to vector<32x256xf32>
    %77 = arith.addf %74, %76 : vector<32x256xf32>
    %78 = vector.shape_cast %77 : vector<32x256xf32> to vector<2x16x256xf32>
    %c0_39 = arith.constant 0 : index
    %c0_40 = arith.constant 0 : index
    %c0_41 = arith.constant 0 : index
    %79 = vector.load %arg7[%c0_39, %c0_40, %c0_41] : memref<2x16x256xf32, #tpu.memory_space<vmem>>, vector<2x16x256xf32>
    tpu.vector_store %arg7[%c0_39, %c0_40, %c0_41], %78 {strides = array<i32>} : memref<2x16x256xf32, #tpu.memory_space<vmem>>, vector<2x16x256xf32>,
    return
  }
  func.func @transform_0(%arg0: i32) -> (i32, i32, i32) {
    %c0_i32 = arith.constant 0 : i32
    %c0_i32_0 = arith.constant 0 : i32
    %c0_i32_1 = arith.constant 0 : i32
    return %arg0, %c0_i32, %c0_i32_0 : i32, i32, i32
  }
  func.func @transform_1(%arg0: i32) -> (i32, i32) {
    %c0_i32 = arith.constant 0 : i32
    %c0_i32_0 = arith.constant 0 : i32
    %c0_i32_1 = arith.constant 0 : i32
    return %c0_i32, %c0_i32_0 : i32, i32
  }
  func.func @transform_2(%arg0: i32) -> (i32, i32) {
    %c0_i32 = arith.constant 0 : i32
    %c0_i32_0 = arith.constant 0 : i32
    %c0_i32_1 = arith.constant 0 : i32
    return %c0_i32, %c0_i32_0 : i32, i32
  }
  func.func @transform_3(%arg0: i32) -> (i32, i32) {
    %c0_i32 = arith.constant 0 : i32
    %c0_i32_0 = arith.constant 0 : i32
    %c0_i32_1 = arith.constant 0 : i32
    return %c0_i32, %c0_i32_0 : i32, i32
  }
  func.func @transform_4(%arg0: i32) -> (i32, i32) {
    %c0_i32 = arith.constant 0 : i32
    %c0_i32_0 = arith.constant 0 : i32
    %c0_i32_1 = arith.constant 0 : i32
    return %c0_i32, %c0_i32_0 : i32, i32
  }
  func.func @transform_5(%arg0: i32) -> (i32, i32) {
    %c0_i32 = arith.constant 0 : i32
    %c0_i32_0 = arith.constant 0 : i32
    %c0_i32_1 = arith.constant 0 : i32
    return %c0_i32, %c0_i32_0 : i32, i32
  }
  func.func @transform_6(%arg0: i32) -> (i32, i32, i32) {
    %c0_i32 = arith.constant 0 : i32
    %c0_i32_0 = arith.constant 0 : i32
    %c0_i32_1 = arith.constant 0 : i32
    return %arg0, %c0_i32, %c0_i32_0 : i32, i32, i32
  }
}

</mosaic_0001>

<llo_original>
// kernel: tpu_custom_call.1
$region0: #{tpu_custom_call.1}
  #allocation0 [shape = 'u32[]', space=smem, size = 0x4, offset = 0x4, fixed_abs, tag = 'smem constant byte address 0x4 - core index']
  #allocation1 [shape = 'u32[144,128]{1,0:T(1,128)}', space=vmem, size = 0x12000, scoped, tag = 'internal scratch']
  #allocation2 [shape = 'f32[32,256]{1,0:T(8,128)}', space=vmem, size = 0x8000, scoped, tag = 'scratch operand']
  %s0 = inlined_call_operand.hbm [shape: f32[2,16,256], index: 0, kind: input, shape index: {}]
  %s1 = inlined_call_operand.hbm [shape: f32[256,256], index: 1, kind: input, shape index: {}]
  %s2 = inlined_call_operand.hbm [shape: f32[256,256], index: 2, kind: input, shape index: {}]
  %s3 = inlined_call_operand.hbm [shape: f32[256,256], index: 3, kind: input, shape index: {}]
  %s4 = inlined_call_operand.hbm [shape: f32[256,256], index: 4, kind: input, shape index: {}]
  %s5 = inlined_call_operand.vmem [shape: f32[1,256], index: 5, kind: input, shape index: {}]
  %s6 = inlined_call_operand.hbm [shape: f32[2,16,256], index: 6, kind: output, shape index: {}]
  %s7 = sld [smem:[#allocation0]]
  $region54: #{tpu_custom_call.1} parent=0
    _
  %s9 = ssub.s32 1, %s7
  %s10 = scalar_select 0, %s9, %s7
  $region1: #{tpu_custom_call.1} parent=0
    #allocation3 [shape = 'u8[32768]{0}', space=vmem, size = 0x8000, scoped, tag = 'input window, operand 0, single buffered']
    #allocation4 [shape = 's32[1]{0}', space=sflag, size = 0x4, scoped, tag = 'scoped memory for tpu_custom_call.1']
    #allocation5 [shape = 's32[1]{0}', space=sflag, size = 0x4, scoped, tag = 'scoped memory for tpu_custom_call.1']
    #allocation6 [shape = 'u8[262144]{0}', space=vmem, size = 0x40000, scoped, tag = 'input window, operand 1, single buffered']
    #allocation7 [shape = 's32[1]{0}', space=sflag, size = 0x4, scoped, tag = 'scoped memory for tpu_custom_call.1']
    #allocation8 [shape = 'u8[262144]{0}', space=vmem, size = 0x40000, scoped, tag = 'input window, operand 2, single buffered']
    #allocation9 [shape = 'u8[262144]{0}', space=vmem, size = 0x40000, scoped, tag = 'input window, operand 3, single buffered']
    #allocation10 [shape = 's32[1]{0}', space=sflag, size = 0x4, scoped, tag = 'scoped memory for tpu_custom_call.1']
    #allocation11 [shape = 'u8[262144]{0}', space=vmem, size = 0x40000, scoped, tag = 'input window, operand 4, single buffered']
    #allocation12 [shape = 'u8[32768]{0}', space=vmem, size = 0x8000, scoped, tag = 'output window, operand 0, single buffered']
    %11 = vsyncpa [#allocation4], 0
    %12 = vsyncpa [#allocation7], 0
    %13 = vsyncpa [#allocation10], 0
    %14 = vsyncpa [#allocation5], 0
    // Predicated region
    $region2: #{tpu_custom_call.1} parent=1 // pred_check
      _
    $region3: #{tpu_custom_call.1} parent=1 // pred_check_branch
      %16 = sbr.rel (0) target = $region5
    $region4: #{tpu_custom_call.1} parent=1 // pred_region
      %s18 = ssub.s32 1024, 1024
      %19 = vsyncadd [#allocation4], %s18
      %s20 = sshll.u32 [#allocation3], 4
      %s21 = int_to_ptr.vmem [resolvable:$true] %s20
      %26 = dma.hbm_to_vmem [thread:$0]  %s0, 1024, %s21, [#allocation4], 256, 256, 16
    $region5: #{tpu_custom_call.1} parent=1 // pred_fallthru
      _
    // Predicated region
    $region6: #{tpu_custom_call.1} parent=1 // pred_check
      _
    $region7: #{tpu_custom_call.1} parent=1 // pred_check_branch
      %28 = sbr.rel (0) target = $region9
    $region8: #{tpu_custom_call.1} parent=1 // pred_region
      %s30 = ssub.s32 8192, 8192
      %31 = vsyncadd [#allocation7], %s30
      %s32 = sshll.u32 [#allocation6], 4
      %s33 = int_to_ptr.vmem [resolvable:$true] %s32
      %38 = dma.hbm_to_vmem [thread:$0]  %s1, 8192, %s33, [#allocation7], 256, 256, 16
    $region9: #{tpu_custom_call.1} parent=1 // pred_fallthru
      _
    // Predicated region
    $region10: #{tpu_custom_call.1} parent=1 // pred_check
      _
    $region11: #{tpu_custom_call.1} parent=1 // pred_check_branch
      %40 = sbr.rel (0) target = $region13
    $region12: #{tpu_custom_call.1} parent=1 // pred_region
      %s42 = ssub.s32 8192, 8192
      %43 = vsyncadd [#allocation7], %s42
      %s44 = sshll.u32 [#allocation8], 4
      %s45 = int_to_ptr.vmem [resolvable:$true] %s44
      %50 = dma.hbm_to_vmem [thread:$0]  %s2, 8192, %s45, [#allocation7], 256, 256, 16
    $region13: #{tpu_custom_call.1} parent=1 // pred_fallthru
      _
    // Predicated region
    $region14: #{tpu_custom_call.1} parent=1 // pred_check
      _
    $region15: #{tpu_custom_call.1} parent=1 // pred_check_branch
      %52 = sbr.rel (0) target = $region17
    $region16: #{tpu_custom_call.1} parent=1 // pred_region
      %s54 = ssub.s32 8192, 8192
      %55 = vsyncadd [#allocation10], %s54
      %s56 = sshll.u32 [#allocation9], 4
      %s57 = int_to_ptr.vmem [resolvable:$true] %s56
      %62 = dma.hbm_to_vmem [thread:$0]  %s3, 8192, %s57, [#allocation10], 256, 256, 16
    $region17: #{tpu_custom_call.1} parent=1 // pred_fallthru
      _
    // Predicated region
    $region18: #{tpu_custom_call.1} parent=1 // pred_check
      _
    $region19: #{tpu_custom_call.1} parent=1 // pred_check_branch
      %64 = sbr.rel (0) target = $region21
    $region20: #{tpu_custom_call.1} parent=1 // pred_region
      %s66 = ssub.s32 8192, 8192
      %67 = vsyncadd [#allocation10], %s66
      %s68 = sshll.u32 [#allocation11], 4
      %s69 = int_to_ptr.vmem [resolvable:$true] %s68
      %74 = dma.hbm_to_vmem [thread:$0]  %s4, 8192, %s69, [#allocation10], 256, 256, 16
    $region21: #{tpu_custom_call.1} parent=1 // pred_fallthru
      _
    // Predicated region
    $region22: #{tpu_custom_call.1} parent=1 // pred_check
      _
    $region23: #{tpu_custom_call.1} parent=1 // pred_check_branch
      %76 = sbr.rel (0) target = $region25
    $region24: #{tpu_custom_call.1} parent=1 // pred_region
      _
    $region25: #{tpu_custom_call.1} parent=1 // pred_fallthru
      _
    // Predicated region
    $region26: #{tpu_custom_call.1} parent=1 // pred_check
      _
    $region27: #{tpu_custom_call.1} parent=1 // pred_check_branch
      %78 = sbr.rel (0) target = $region29
    $region28: #{tpu_custom_call.1} parent=1 // pred_region
      %79 = dma.done [#allocation4], 1024
    $region29: #{tpu_custom_call.1} parent=1 // pred_fallthru
      _
    // Predicated region
    $region30: #{tpu_custom_call.1} parent=1 // pred_check
      _
    $region31: #{tpu_custom_call.1} parent=1 // pred_check_branch
      %81 = sbr.rel (0) target = $region33
    $region32: #{tpu_custom_call.1} parent=1 // pred_region
      %82 = dma.done [#allocation7], 8192
    $region33: #{tpu_custom_call.1} parent=1 // pred_fallthru
      _
    // Predicated region
    $region34: #{tpu_custom_call.1} parent=1 // pred_check
      _
    $region35: #{tpu_custom_call.1} parent=1 // pred_check_branch
      %84 = sbr.rel (0) target = $region37
    $region36: #{tpu_custom_call.1} parent=1 // pred_region
      %85 = dma.done [#allocation7], 8192
    $region37: #{tpu_custom_call.1} parent=1 // pred_fallthru
      _
    // Predicated region
    $region38: #{tpu_custom_call.1} parent=1 // pred_check
      _
    $region39: #{tpu_custom_call.1} parent=1 // pred_check_branch
      %87 = sbr.rel (0) target = $region41
    $region40: #{tpu_custom_call.1} parent=1 // pred_region
      %88 = dma.done [#allocation10], 8192
    $region41: #{tpu_custom_call.1} parent=1 // pred_fallthru
      _
    // Predicated region
    $region42: #{tpu_custom_call.1} parent=1 // pred_check
      _
    $region43: #{tpu_custom_call.1} parent=1 // pred_check_branch
      %90 = sbr.rel (0) target = $region45
    $region44: #{tpu_custom_call.1} parent=1 // pred_region
      %91 = dma.done [#allocation10], 8192
    $region45: #{tpu_custom_call.1} parent=1 // pred_fallthru
      _
    %v92 = vld [vmem:[#allocation3] sm:$0xff]
    %v93 = vld [vmem:[#allocation3 + $0x8] sm:$0xff]
    %v94 = vld [vmem:[#allocation3 + $0x10] sm:$0xff]
    %v95 = vld [vmem:[#allocation3 + $0x18] sm:$0xff]
    %v96 = vld [vmem:[#allocation3 + $0x20] sm:$0xff]
    %v97 = vld [vmem:[#allocation3 + $0x28] sm:$0xff]
    %v98 = vld [vmem:[#allocation3 + $0x30] sm:$0xff]
    %v99 = vld [vmem:[#allocation3 + $0x38] sm:$0xff]
    %v100 = vld [vmem:[#allocation6] sm:$0xff]
    %v101 = vld [vmem:[#allocation6 + $0x8] sm:$0xff]
    %v102 = vld [vmem:[#allocation6 + $0x10] sm:$0xff]
    %v103 = vld [vmem:[#allocation6 + $0x18] sm:$0xff]
    %v104 = vld [vmem:[#allocation6 + $0x20] sm:$0xff]
    %v105 = vld [vmem:[#allocation6 + $0x28] sm:$0xff]
    %v106 = vld [vmem:[#allocation6 + $0x30] sm:$0xff]
    %v107 = vld [vmem:[#allocation6 + $0x38] sm:$0xff]
    %v108 = vld [vmem:[#allocation6 + $0x40] sm:$0xff]
    %v109 = vld [vmem:[#allocation6 + $0x48] sm:$0xff]
    %v110 = vld [vmem:[#allocation6 + $0x50] sm:$0xff]
    %v111 = vld [vmem:[#allocation6 + $0x58] sm:$0xff]
    %v112 = vld [vmem:[#allocation6 + $0x60] sm:$0xff]
    %v113 = vld [vmem:[#allocation6 + $0x68] sm:$0xff]
    %v114 = vld [vmem:[#allocation6 + $0x70] sm:$0xff]
    %v115 = vld [vmem:[#allocation6 + $0x78] sm:$0xff]
    %v116 = vld [vmem:[#allocation6 + $0x80] sm:$0xff]
    %v117 = vld [vmem:[#allocation6 + $0x88] sm:$0xff]
    %v118 = vld [vmem:[#allocation6 + $0x90] sm:$0xff]
    %v119 = vld [vmem:[#allocation6 + $0x98] sm:$0xff]
    %v120 = vld [vmem:[#allocation6 + $0xa0] sm:$0xff]
    %v121 = vld [vmem:[#allocation6 + $0xa8] sm:$0xff]
    %v122 = vld [vmem:[#allocation6 + $0xb0] sm:$0xff]
    %v123 = vld [vmem:[#allocation6 + $0xb8] sm:$0xff]
    %v124 = vld [vmem:[#allocation6 + $0xc0] sm:$0xff]
    %v125 = vld [vmem:[#allocation6 + $0xc8] sm:$0xff]
    %v126 = vld [vmem:[#allocation6 + $0xd0] sm:$0xff]
    %v127 = vld [vmem:[#allocation6 + $0xd8] sm:$0xff]
    %v128 = vld [vmem:[#allocation6 + $0xe0] sm:$0xff]
    %v129 = vld [vmem:[#allocation6 + $0xe8] sm:$0xff]
    %v130 = vld [vmem:[#allocation6 + $0xf0] sm:$0xff]
    %v131 = vld [vmem:[#allocation6 + $0xf8] sm:$0xff]
    %v132 = vld [vmem:[#allocation6 + $0x100] sm:$0xff]
    %v133 = vld [vmem:[#allocation6 + $0x108] sm:$0xff]
    %v134 = vld [vmem:[#allocation6 + $0x110] sm:$0xff]
    %v135 = vld [vmem:[#allocation6 + $0x118] sm:$0xff]
    %v136 = vld [vmem:[#allocation6 + $0x120] sm:$0xff]
    %v137 = vld [vmem:[#allocation6 + $0x128] sm:$0xff]
    %v138 = vld [vmem:[#allocation6 + $0x130] sm:$0xff]
    %v139 = vld [vmem:[#allocation6 + $0x138] sm:$0xff]
    %v140 = vld [vmem:[#allocation6 + $0x140] sm:$0xff]
    %v141 = vld [vmem:[#allocation6 + $0x148] sm:$0xff]
    %v142 = vld [vmem:[#allocation6 + $0x150] sm:$0xff]
    %v143 = vld [vmem:[#allocation6 + $0x158] sm:$0xff]
    %v144 = vld [vmem:[#allocation6 + $0x160] sm:$0xff]
    %v145 = vld [vmem:[#allocation6 + $0x168] sm:$0xff]
    %v146 = vld [vmem:[#allocation6 + $0x170] sm:$0xff]
    %v147 = vld [vmem:[#allocation6 + $0x178] sm:$0xff]
    %v148 = vld [vmem:[#allocation6 + $0x180] sm:$0xff]
    %v149 = vld [vmem:[#allocation6 + $0x188] sm:$0xff]
    %v150 = vld [vmem:[#allocation6 + $0x190] sm:$0xff]
    %v151 = vld [vmem:[#allocation6 + $0x198] sm:$0xff]
    %v152 = vld [vmem:[#allocation6 + $0x1a0] sm:$0xff]
    %v153 = vld [vmem:[#allocation6 + $0x1a8] sm:$0xff]
    %v154 = vld [vmem:[#allocation6 + $0x1b0] sm:$0xff]
    %v155 = vld [vmem:[#allocation6 + $0x1b8] sm:$0xff]
    %v156 = vld [vmem:[#allocation6 + $0x1c0] sm:$0xff]
    %v157 = vld [vmem:[#allocation6 + $0x1c8] sm:$0xff]
    %v158 = vld [vmem:[#allocation6 + $0x1d0] sm:$0xff]
    %v159 = vld [vmem:[#allocation6 + $0x1d8] sm:$0xff]
    %v160 = vld [vmem:[#allocation6 + $0x1e0] sm:$0xff]
    %v161 = vld [vmem:[#allocation6 + $0x1e8] sm:$0xff]
    %v162 = vld [vmem:[#allocation6 + $0x1f0] sm:$0xff]
    %v163 = vld [vmem:[#allocation6 + $0x1f8] sm:$0xff]
    %164 = vmatprep.subr.mxu0 %v131
    %165 = vmatpush1.msra.mxu0 %v130
    %166 = vmatprep.subr.mxu0 %v129
    %167 = vmatpush1.msra.mxu0 %v128
    %168 = vmatprep.subr.mxu0 %v127
    %169 = vmatpush1.msra.mxu0 %v126
    %170 = vmatprep.subr.mxu0 %v125
    %171 = vmatpush1.msra.mxu0 %v124
    %172 = vmatprep.subr.mxu0 %v123
    %173 = vmatpush1.msra.mxu0 %v122
    %174 = vmatprep.subr.mxu0 %v121
    %175 = vmatpush1.msra.mxu0 %v120
    %176 = vmatprep.subr.mxu0 %v119
    %177 = vmatpush1.msra.mxu0 %v118
    %178 = vmatprep.subr.mxu0 %v117
    %179 = vmatpush1.msra.mxu0 %v116
    %180 = vmatprep.subr.mxu0 %v115
    %181 = vmatpush1.msra.mxu0 %v114
    %182 = vmatprep.subr.mxu0 %v113
    %183 = vmatpush1.msra.mxu0 %v112
    %184 = vmatprep.subr.mxu0 %v111
    %185 = vmatpush1.msra.mxu0 %v110
    %186 = vmatprep.subr.mxu0 %v109
    %187 = vmatpush1.msra.mxu0 %v108
    %188 = vmatprep.subr.mxu0 %v107
    %189 = vmatpush1.msra.mxu0 %v106
    %190 = vmatprep.subr.mxu0 %v105
    %191 = vmatpush1.msra.mxu0 %v104
    %192 = vmatprep.subr.mxu0 %v103
    %193 = vmatpush1.msra.mxu0 %v102
    %194 = vmatprep.subr.mxu0 %v101
    %195 = vmatpush1.msra.mxu0 %v100
    %196 = vmatprep.subr.mxu0 %v163
    %197 = vmatpush2.msra.mxu0 %v162
    %198 = vmatprep.subr.mxu0 %v161
    %199 = vmatpush2.msra.mxu0 %v160
    %200 = vmatprep.subr.mxu0 %v159
    %201 = vmatpush2.msra.mxu0 %v158
    %202 = vmatprep.subr.mxu0 %v157
    %203 = vmatpush2.msra.mxu0 %v156
    %204 = vmatprep.subr.mxu0 %v155
    %205 = vmatpush2.msra.mxu0 %v154
    %206 = vmatprep.subr.mxu0 %v153
    %207 = vmatpush2.msra.mxu0 %v152
    %208 = vmatprep.subr.mxu0 %v151
    %209 = vmatpush2.msra.mxu0 %v150
    %210 = vmatprep.subr.mxu0 %v149
    %211 = vmatpush2.msra.mxu0 %v148
    %212 = vmatprep.subr.mxu0 %v147
    %213 = vmatpush2.msra.mxu0 %v146
    %214 = vmatprep.subr.mxu0 %v145
    %215 = vmatpush2.msra.mxu0 %v144
    %216 = vmatprep.subr.mxu0 %v143
    %217 = vmatpush2.msra.mxu0 %v142
    %218 = vmatprep.subr.mxu0 %v141
    %219 = vmatpush2.msra.mxu0 %v140
    %220 = vmatprep.subr.mxu0 %v139
    %221 = vmatpush2.msra.mxu0 %v138
    %222 = vmatprep.subr.mxu0 %v137
    %223 = vmatpush2.msra.mxu0 %v136
    %224 = vmatprep.subr.mxu0 %v135
    %225 = vmatpush2.msra.mxu0 %v134
    %226 = vmatprep.subr.mxu0 %v133
    %227 = vmatpush2.msra.mxu0 %v132
    %228 = vmatprep.mubr.f32.mxu0 %v93
    %229 = vmatmul.mubr.f32.gmra.mxu0 %v92
    %v230 = vpop.f32.mrf.mxu0
    %v231 = vadd.f32 0.0, %v230
    %v232 = vpop.f32.mrf.mxu0
    %v233 = vadd.f32 0.0, %v232
    %234 = vmatprep.mubr.f32.mxu0 %v95
    %235 = vmatmul.mubr.f32.gmra.mxu0 %v94
    %v236 = vpop.f32.mrf.mxu0
    %v237 = vadd.f32 0.0, %v236
    %v238 = vpop.f32.mrf.mxu0
    %v239 = vadd.f32 0.0, %v238
    %240 = vmatprep.mubr.f32.mxu0 %v97
    %241 = vmatmul.mubr.f32.gmra.mxu0 %v96
    %v242 = vpop.f32.mrf.mxu0
    %v243 = vadd.f32 0.0, %v242
    %v244 = vpop.f32.mrf.mxu0
    %v245 = vadd.f32 0.0, %v244
    %246 = vmatprep.mubr.f32.mxu0 %v99
    %247 = vmatmul.mubr.f32.gmra.mxu0 %v98
    %v248 = vpop.f32.mrf.mxu0
    %v249 = vadd.f32 0.0, %v248
    %v250 = vpop.f32.mrf.mxu0
    %v251 = vadd.f32 0.0, %v250
    %252 = vdwg.mxu0
    %v253 = vld [vmem:[#allocation8] sm:$0xff]
    %v254 = vld [vmem:[#allocation8 + $0x8] sm:$0xff]
    %v255 = vld [vmem:[#allocation8 + $0x10] sm:$0xff]
    %v256 = vld [vmem:[#allocation8 + $0x18] sm:$0xff]
    %v257 = vld [vmem:[#allocation8 + $0x20] sm:$0xff]
    %v258 = vld [vmem:[#allocation8 + $0x28] sm:$0xff]
    %v259 = vld [vmem:[#allocation8 + $0x30] sm:$0xff]
    %v260 = vld [vmem:[#allocation8 + $0x38] sm:$0xff]
    %v261 = vld [vmem:[#allocation8 + $0x40] sm:$0xff]
    %v262 = vld [vmem:[#allocation8 + $0x48] sm:$0xff]
    %v263 = vld [vmem:[#allocation8 + $0x50] sm:$0xff]
    %v264 = vld [vmem:[#allocation8 + $0x58] sm:$0xff]
    %v265 = vld [vmem:[#allocation8 + $0x60] sm:$0xff]
    %v266 = vld [vmem:[#allocation8 + $0x68] sm:$0xff]
    %v267 = vld [vmem:[#allocation8 + $0x70] sm:$0xff]
    %v268 = vld [vmem:[#allocation8 + $0x78] sm:$0xff]
    %v269 = vld [vmem:[#allocation8 + $0x80] sm:$0xff]
    %v270 = vld [vmem:[#allocation8 + $0x88] sm:$0xff]
    %v271 = vld [vmem:[#allocation8 + $0x90] sm:$0xff]
    %v272 = vld [vmem:[#allocation8 + $0x98] sm:$0xff]
    %v273 = vld [vmem:[#allocation8 + $0xa0] sm:$0xff]
    %v274 = vld [vmem:[#allocation8 + $0xa8] sm:$0xff]
    %v275 = vld [vmem:[#allocation8 + $0xb0] sm:$0xff]
    %v276 = vld [vmem:[#allocation8 + $0xb8] sm:$0xff]
    %v277 = vld [vmem:[#allocation8 + $0xc0] sm:$0xff]
    %v278 = vld [vmem:[#allocation8 + $0xc8] sm:$0xff]
    %v279 = vld [vmem:[#allocation8 + $0xd0] sm:$0xff]
    %v280 = vld [vmem:[#allocation8 + $0xd8] sm:$0xff]
    %v281 = vld [vmem:[#allocation8 + $0xe0] sm:$0xff]
    %v282 = vld [vmem:[#allocation8 + $0xe8] sm:$0xff]
    %v283 = vld [vmem:[#allocation8 + $0xf0] sm:$0xff]
    %v284 = vld [vmem:[#allocation8 + $0xf8] sm:$0xff]
    %v285 = vld [vmem:[#allocation8 + $0x100] sm:$0xff]
    %v286 = vld [vmem:[#allocation8 + $0x108] sm:$0xff]
    %v287 = vld [vmem:[#allocation8 + $0x110] sm:$0xff]
    %v288 = vld [vmem:[#allocation8 + $0x118] sm:$0xff]
    %v289 = vld [vmem:[#allocation8 + $0x120] sm:$0xff]
    %v290 = vld [vmem:[#allocation8 + $0x128] sm:$0xff]
    %v291 = vld [vmem:[#allocation8 + $0x130] sm:$0xff]
    %v292 = vld [vmem:[#allocation8 + $0x138] sm:$0xff]
    %v293 = vld [vmem:[#allocation8 + $0x140] sm:$0xff]
    %v294 = vld [vmem:[#allocation8 + $0x148] sm:$0xff]
    %v295 = vld [vmem:[#allocation8 + $0x150] sm:$0xff]
    %v296 = vld [vmem:[#allocation8 + $0x158] sm:$0xff]
    %v297 = vld [vmem:[#allocation8 + $0x160] sm:$0xff]
    %v298 = vld [vmem:[#allocation8 + $0x168] sm:$0xff]
    %v299 = vld [vmem:[#allocation8 + $0x170] sm:$0xff]
    %v300 = vld [vmem:[#allocation8 + $0x178] sm:$0xff]
    %v301 = vld [vmem:[#allocation8 + $0x180] sm:$0xff]
    %v302 = vld [vmem:[#allocation8 + $0x188] sm:$0xff]
    %v303 = vld [vmem:[#allocation8 + $0x190] sm:$0xff]
    %v304 = vld [vmem:[#allocation8 + $0x198] sm:$0xff]
    %v305 = vld [vmem:[#allocation8 + $0x1a0] sm:$0xff]
    %v306 = vld [vmem:[#allocation8 + $0x1a8] sm:$0xff]
    %v307 = vld [vmem:[#allocation8 + $0x1b0] sm:$0xff]
    %v308 = vld [vmem:[#allocation8 + $0x1b8] sm:$0xff]
    %v309 = vld [vmem:[#allocation8 + $0x1c0] sm:$0xff]
    %v310 = vld [vmem:[#allocation8 + $0x1c8] sm:$0xff]
    %v311 = vld [vmem:[#allocation8 + $0x1d0] sm:$0xff]
    %v312 = vld [vmem:[#allocation8 + $0x1d8] sm:$0xff]
    %v313 = vld [vmem:[#allocation8 + $0x1e0] sm:$0xff]
    %v314 = vld [vmem:[#allocation8 + $0x1e8] sm:$0xff]
    %v315 = vld [vmem:[#allocation8 + $0x1f0] sm:$0xff]
    %v316 = vld [vmem:[#allocation8 + $0x1f8] sm:$0xff]
    %317 = vmatprep.subr.mxu0 %v284
    %318 = vmatpush1.msra.mxu0 %v283
    %319 = vmatprep.subr.mxu0 %v282
    %320 = vmatpush1.msra.mxu0 %v281
    %321 = vmatprep.subr.mxu0 %v280
    %322 = vmatpush1.msra.mxu0 %v279
    %323 = vmatprep.subr.mxu0 %v278
    %324 = vmatpush1.msra.mxu0 %v277
    %325 = vmatprep.subr.mxu0 %v276
    %326 = vmatpush1.msra.mxu0 %v275
    %327 = vmatprep.subr.mxu0 %v274
    %328 = vmatpush1.msra.mxu0 %v273
    %329 = vmatprep.subr.mxu0 %v272
    %330 = vmatpush1.msra.mxu0 %v271
    %331 = vmatprep.subr.mxu0 %v270
    %332 = vmatpush1.msra.mxu0 %v269
    %333 = vmatprep.subr.mxu0 %v268
    %334 = vmatpush1.msra.mxu0 %v267
    %335 = vmatprep.subr.mxu0 %v266
    %336 = vmatpush1.msra.mxu0 %v265
    %337 = vmatprep.subr.mxu0 %v264
    %338 = vmatpush1.msra.mxu0 %v263
    %339 = vmatprep.subr.mxu0 %v262
    %340 = vmatpush1.msra.mxu0 %v261
    %341 = vmatprep.subr.mxu0 %v260
    %342 = vmatpush1.msra.mxu0 %v259
    %343 = vmatprep.subr.mxu0 %v258
    %344 = vmatpush1.msra.mxu0 %v257
    %345 = vmatprep.subr.mxu0 %v256
    %346 = vmatpush1.msra.mxu0 %v255
    %347 = vmatprep.subr.mxu0 %v254
    %348 = vmatpush1.msra.mxu0 %v253
    %349 = vmatprep.subr.mxu0 %v316
    %350 = vmatpush2.msra.mxu0 %v315
    %351 = vmatprep.subr.mxu0 %v314
    %352 = vmatpush2.msra.mxu0 %v313
    %353 = vmatprep.subr.mxu0 %v312
    %354 = vmatpush2.msra.mxu0 %v311
    %355 = vmatprep.subr.mxu0 %v310
    %356 = vmatpush2.msra.mxu0 %v309
    %357 = vmatprep.subr.mxu0 %v308
    %358 = vmatpush2.msra.mxu0 %v307
    %359 = vmatprep.subr.mxu0 %v306
    %360 = vmatpush2.msra.mxu0 %v305
    %361 = vmatprep.subr.mxu0 %v304
    %362 = vmatpush2.msra.mxu0 %v303
    %363 = vmatprep.subr.mxu0 %v302
    %364 = vmatpush2.msra.mxu0 %v301
    %365 = vmatprep.subr.mxu0 %v300
    %366 = vmatpush2.msra.mxu0 %v299
    %367 = vmatprep.subr.mxu0 %v298
    %368 = vmatpush2.msra.mxu0 %v297
    %369 = vmatprep.subr.mxu0 %v296
    %370 = vmatpush2.msra.mxu0 %v295
    %371 = vmatprep.subr.mxu0 %v294
    %372 = vmatpush2.msra.mxu0 %v293
    %373 = vmatprep.subr.mxu0 %v292
    %374 = vmatpush2.msra.mxu0 %v291
    %375 = vmatprep.subr.mxu0 %v290
    %376 = vmatpush2.msra.mxu0 %v289
    %377 = vmatprep.subr.mxu0 %v288
    %378 = vmatpush2.msra.mxu0 %v287
    %379 = vmatprep.subr.mxu0 %v286
    %380 = vmatpush2.msra.mxu0 %v285
    %381 = vmatprep.mubr.f32.mxu0 %v93
    %382 = vmatmul.mubr.f32.gmra.mxu0 %v92
    %v383 = vpop.f32.mrf.mxu0
    %v384 = vadd.f32 0.0, %v383
    %v385 = vpop.f32.mrf.mxu0
    %v386 = vadd.f32 0.0, %v385
    %387 = vmatprep.mubr.f32.mxu0 %v95
    %388 = vmatmul.mubr.f32.gmra.mxu0 %v94
    %v389 = vpop.f32.mrf.mxu0
    %v390 = vadd.f32 0.0, %v389
    %v391 = vpop.f32.mrf.mxu0
    %v392 = vadd.f32 0.0, %v391
    %393 = vmatprep.mubr.f32.mxu0 %v97
    %394 = vmatmul.mubr.f32.gmra.mxu0 %v96
    %v395 = vpop.f32.mrf.mxu0
    %v396 = vadd.f32 0.0, %v395
    %v397 = vpop.f32.mrf.mxu0
    %v398 = vadd.f32 0.0, %v397
    %399 = vmatprep.mubr.f32.mxu0 %v99
    %400 = vmatmul.mubr.f32.gmra.mxu0 %v98
    %v401 = vpop.f32.mrf.mxu0
    %v402 = vadd.f32 0.0, %v401
    %v403 = vpop.f32.mrf.mxu0
    %v404 = vadd.f32 0.0, %v403
    %405 = vdwg.mxu0
    %v406 = vld [vmem:[#allocation9] sm:$0xff]
    %v407 = vld [vmem:[#allocation9 + $0x8] sm:$0xff]
    %v408 = vld [vmem:[#allocation9 + $0x10] sm:$0xff]
    %v409 = vld [vmem:[#allocation9 + $0x18] sm:$0xff]
    %v410 = vld [vmem:[#allocation9 + $0x20] sm:$0xff]
    %v411 = vld [vmem:[#allocation9 + $0x28] sm:$0xff]
    %v412 = vld [vmem:[#allocation9 + $0x30] sm:$0xff]
    %v413 = vld [vmem:[#allocation9 + $0x38] sm:$0xff]
    %v414 = vld [vmem:[#allocation9 + $0x40] sm:$0xff]
    %v415 = vld [vmem:[#allocation9 + $0x48] sm:$0xff]
    %v416 = vld [vmem:[#allocation9 + $0x50] sm:$0xff]
    %v417 = vld [vmem:[#allocation9 + $0x58] sm:$0xff]
    %v418 = vld [vmem:[#allocation9 + $0x60] sm:$0xff]
    %v419 = vld [vmem:[#allocation9 + $0x68] sm:$0xff]
    %v420 = vld [vmem:[#allocation9 + $0x70] sm:$0xff]
    %v421 = vld [vmem:[#allocation9 + $0x78] sm:$0xff]
    %v422 = vld [vmem:[#allocation9 + $0x80] sm:$0xff]
    %v423 = vld [vmem:[#allocation9 + $0x88] sm:$0xff]
    %v424 = vld [vmem:[#allocation9 + $0x90] sm:$0xff]
    %v425 = vld [vmem:[#allocation9 + $0x98] sm:$0xff]
    %v426 = vld [vmem:[#allocation9 + $0xa0] sm:$0xff]
    %v427 = vld [vmem:[#allocation9 + $0xa8] sm:$0xff]
    %v428 = vld [vmem:[#allocation9 + $0xb0] sm:$0xff]
    %v429 = vld [vmem:[#allocation9 + $0xb8] sm:$0xff]
    %v430 = vld [vmem:[#allocation9 + $0xc0] sm:$0xff]
    %v431 = vld [vmem:[#allocation9 + $0xc8] sm:$0xff]
    %v432 = vld [vmem:[#allocation9 + $0xd0] sm:$0xff]
    %v433 = vld [vmem:[#allocation9 + $0xd8] sm:$0xff]
    %v434 = vld [vmem:[#allocation9 + $0xe0] sm:$0xff]
    %v435 = vld [vmem:[#allocation9 + $0xe8] sm:$0xff]
    %v436 = vld [vmem:[#allocation9 + $0xf0] sm:$0xff]
    %v437 = vld [vmem:[#allocation9 + $0xf8] sm:$0xff]
    %v438 = vld [vmem:[#allocation9 + $0x100] sm:$0xff]
    %v439 = vld [vmem:[#allocation9 + $0x108] sm:$0xff]
    %v440 = vld [vmem:[#allocation9 + $0x110] sm:$0xff]
    %v441 = vld [vmem:[#allocation9 + $0x118] sm:$0xff]
    %v442 = vld [vmem:[#allocation9 + $0x120] sm:$0xff]
    %v443 = vld [vmem:[#allocation9 + $0x128] sm:$0xff]
    %v444 = vld [vmem:[#allocation9 + $0x130] sm:$0xff]
    %v445 = vld [vmem:[#allocation9 + $0x138] sm:$0xff]
    %v446 = vld [vmem:[#allocation9 + $0x140] sm:$0xff]
    %v447 = vld [vmem:[#allocation9 + $0x148] sm:$0xff]
    %v448 = vld [vmem:[#allocation9 + $0x150] sm:$0xff]
    %v449 = vld [vmem:[#allocation9 + $0x158] sm:$0xff]
    %v450 = vld [vmem:[#allocation9 + $0x160] sm:$0xff]
    %v451 = vld [vmem:[#allocation9 + $0x168] sm:$0xff]
    %v452 = vld [vmem:[#allocation9 + $0x170] sm:$0xff]
    %v453 = vld [vmem:[#allocation9 + $0x178] sm:$0xff]
    %v454 = vld [vmem:[#allocation9 + $0x180] sm:$0xff]
    %v455 = vld [vmem:[#allocation9 + $0x188] sm:$0xff]
    %v456 = vld [vmem:[#allocation9 + $0x190] sm:$0xff]
    %v457 = vld [vmem:[#allocation9 + $0x198] sm:$0xff]
    %v458 = vld [vmem:[#allocation9 + $0x1a0] sm:$0xff]
    %v459 = vld [vmem:[#allocation9 + $0x1a8] sm:$0xff]
    %v460 = vld [vmem:[#allocation9 + $0x1b0] sm:$0xff]
    %v461 = vld [vmem:[#allocation9 + $0x1b8] sm:$0xff]
    %v462 = vld [vmem:[#allocation9 + $0x1c0] sm:$0xff]
    %v463 = vld [vmem:[#allocation9 + $0x1c8] sm:$0xff]
    %v464 = vld [vmem:[#allocation9 + $0x1d0] sm:$0xff]
    %v465 = vld [vmem:[#allocation9 + $0x1d8] sm:$0xff]
    %v466 = vld [vmem:[#allocation9 + $0x1e0] sm:$0xff]
    %v467 = vld [vmem:[#allocation9 + $0x1e8] sm:$0xff]
    %v468 = vld [vmem:[#allocation9 + $0x1f0] sm:$0xff]
    %v469 = vld [vmem:[#allocation9 + $0x1f8] sm:$0xff]
    %470 = vmatprep.subr.mxu0 %v437
    %471 = vmatpush1.msra.mxu0 %v436
    %472 = vmatprep.subr.mxu0 %v435
    %473 = vmatpush1.msra.mxu0 %v434
    %474 = vmatprep.subr.mxu0 %v433
    %475 = vmatpush1.msra.mxu0 %v432
    %476 = vmatprep.subr.mxu0 %v431
    %477 = vmatpush1.msra.mxu0 %v430
    %478 = vmatprep.subr.mxu0 %v429
    %479 = vmatpush1.msra.mxu0 %v428
    %480 = vmatprep.subr.mxu0 %v427
    %481 = vmatpush1.msra.mxu0 %v426
    %482 = vmatprep.subr.mxu0 %v425
    %483 = vmatpush1.msra.mxu0 %v424
    %484 = vmatprep.subr.mxu0 %v423
    %485 = vmatpush1.msra.mxu0 %v422
    %486 = vmatprep.subr.mxu0 %v421
    %487 = vmatpush1.msra.mxu0 %v420
    %488 = vmatprep.subr.mxu0 %v419
    %489 = vmatpush1.msra.mxu0 %v418
    %490 = vmatprep.subr.mxu0 %v417
    %491 = vmatpush1.msra.mxu0 %v416
    %492 = vmatprep.subr.mxu0 %v415
    %493 = vmatpush1.msra.mxu0 %v414
    %494 = vmatprep.subr.mxu0 %v413
    %495 = vmatpush1.msra.mxu0 %v412
    %496 = vmatprep.subr.mxu0 %v411
    %497 = vmatpush1.msra.mxu0 %v410
    %498 = vmatprep.subr.mxu0 %v409
    %499 = vmatpush1.msra.mxu0 %v408
    %500 = vmatprep.subr.mxu0 %v407
    %501 = vmatpush1.msra.mxu0 %v406
    %502 = vmatprep.subr.mxu0 %v469
    %503 = vmatpush2.msra.mxu0 %v468
    %504 = vmatprep.subr.mxu0 %v467
    %505 = vmatpush2.msra.mxu0 %v466
    %506 = vmatprep.subr.mxu0 %v465
    %507 = vmatpush2.msra.mxu0 %v464
    %508 = vmatprep.subr.mxu0 %v463
    %509 = vmatpush2.msra.mxu0 %v462
    %510 = vmatprep.subr.mxu0 %v461
    %511 = vmatpush2.msra.mxu0 %v460
    %512 = vmatprep.subr.mxu0 %v459
    %513 = vmatpush2.msra.mxu0 %v458
    %514 = vmatprep.subr.mxu0 %v457
    %515 = vmatpush2.msra.mxu0 %v456
    %516 = vmatprep.subr.mxu0 %v455
    %517 = vmatpush2.msra.mxu0 %v454
    %518 = vmatprep.subr.mxu0 %v453
    %519 = vmatpush2.msra.mxu0 %v452
    %520 = vmatprep.subr.mxu0 %v451
    %521 = vmatpush2.msra.mxu0 %v450
    %522 = vmatprep.subr.mxu0 %v449
    %523 = vmatpush2.msra.mxu0 %v448
    %524 = vmatprep.subr.mxu0 %v447
    %525 = vmatpush2.msra.mxu0 %v446
    %526 = vmatprep.subr.mxu0 %v445
    %527 = vmatpush2.msra.mxu0 %v444
    %528 = vmatprep.subr.mxu0 %v443
    %529 = vmatpush2.msra.mxu0 %v442
    %530 = vmatprep.subr.mxu0 %v441
    %531 = vmatpush2.msra.mxu0 %v440
    %532 = vmatprep.subr.mxu0 %v439
    %533 = vmatpush2.msra.mxu0 %v438
    %534 = vmatprep.mubr.f32.mxu0 %v93
    %535 = vmatmul.mubr.f32.gmra.mxu0 %v92
    %v536 = vpop.f32.mrf.mxu0
    %v537 = vadd.f32 0.0, %v536
    %v538 = vpop.f32.mrf.mxu0
    %v539 = vadd.f32 0.0, %v538
    %540 = vmatprep.mubr.f32.mxu0 %v95
    %541 = vmatmul.mubr.f32.gmra.mxu0 %v94
    %v542 = vpop.f32.mrf.mxu0
    %v543 = vadd.f32 0.0, %v542
    %v544 = vpop.f32.mrf.mxu0
    %v545 = vadd.f32 0.0, %v544
    %546 = vmatprep.mubr.f32.mxu0 %v97
    %547 = vmatmul.mubr.f32.gmra.mxu0 %v96
    %v548 = vpop.f32.mrf.mxu0
    %v549 = vadd.f32 0.0, %v548
    %v550 = vpop.f32.mrf.mxu0
    %v551 = vadd.f32 0.0, %v550
    %552 = vmatprep.mubr.f32.mxu0 %v99
    %553 = vmatmul.mubr.f32.gmra.mxu0 %v98
    %v554 = vpop.f32.mrf.mxu0
    %v555 = vadd.f32 0.0, %v554
    %v556 = vpop.f32.mrf.mxu0
    %v557 = vadd.f32 0.0, %v556
    %558 = vdwg.mxu0
    %559 = vmatprep.subr.mxu0 0.0
    %560 = vmatpush1.xpose.msra.mxu0 0.0
    %561 = vmatprep.subr.mxu0 0.0
    %562 = vmatpush1.xpose.msra.mxu0 0.0
    %563 = vmatprep.subr.mxu0 0.0
    %564 = vmatpush1.xpose.msra.mxu0 0.0
    %565 = vmatprep.subr.mxu0 0.0
    %566 = vmatpush1.xpose.msra.mxu0 0.0
    %567 = vmatprep.subr.mxu0 0.0
    %568 = vmatpush1.xpose.msra.mxu0 0.0
    %569 = vmatprep.subr.mxu0 0.0
    %570 = vmatpush1.xpose.msra.mxu0 0.0
    %571 = vmatprep.subr.mxu0 0.0
    %572 = vmatpush1.xpose.msra.mxu0 0.0
    %573 = vmatprep.subr.mxu0 0.0
    %574 = vmatpush1.xpose.msra.mxu0 0.0
    %575 = vmatprep.subr.mxu0 0.0
    %576 = vmatpush1.xpose.msra.mxu0 0.0
    %577 = vmatprep.subr.mxu0 0.0
    %578 = vmatpush1.xpose.msra.mxu0 0.0
    %579 = vmatprep.subr.mxu0 0.0
    %580 = vmatpush1.xpose.msra.mxu0 0.0
    %581 = vmatprep.subr.mxu0 0.0
    %582 = vmatpush1.xpose.msra.mxu0 0.0
    %583 = vmatprep.subr.mxu0 0.0
    %584 = vmatpush1.xpose.msra.mxu0 0.0
    %585 = vmatprep.subr.mxu0 0.0
    %586 = vmatpush1.xpose.msra.mxu0 0.0
    %587 = vmatprep.subr.mxu0 0.0
    %588 = vmatpush1.xpose.msra.mxu0 %v390
    %589 = vmatprep.subr.mxu0 0.0
    %590 = vmatpush1.xpose.msra.mxu0 %v384
    %591 = vmatprep.subr.mxu0 0.0
    %592 = vmatpush2.xpose.msra.mxu0 0.0
    %593 = vmatprep.subr.mxu0 0.0
    %594 = vmatpush2.xpose.msra.mxu0 0.0
    %595 = vmatprep.subr.mxu0 0.0
    %596 = vmatpush2.xpose.msra.mxu0 0.0
    %597 = vmatprep.subr.mxu0 0.0
    %598 = vmatpush2.xpose.msra.mxu0 0.0
    %599 = vmatprep.subr.mxu0 0.0
    %600 = vmatpush2.xpose.msra.mxu0 0.0
    %601 = vmatprep.subr.mxu0 0.0
    %602 = vmatpush2.xpose.msra.mxu0 0.0
    %603 = vmatprep.subr.mxu0 0.0
    %604 = vmatpush2.xpose.msra.mxu0 0.0
    %605 = vmatprep.subr.mxu0 0.0
    %606 = vmatpush2.xpose.msra.mxu0 0.0
    %607 = vmatprep.subr.mxu0 0.0
    %608 = vmatpush2.xpose.msra.mxu0 0.0
    %609 = vmatprep.subr.mxu0 0.0
    %610 = vmatpush2.xpose.msra.mxu0 0.0
    %611 = vmatprep.subr.mxu0 0.0
    %612 = vmatpush2.xpose.msra.mxu0 0.0
    %613 = vmatprep.subr.mxu0 0.0
    %614 = vmatpush2.xpose.msra.mxu0 0.0
    %615 = vmatprep.subr.mxu0 0.0
    %616 = vmatpush2.xpose.msra.mxu0 0.0
    %617 = vmatprep.subr.mxu0 0.0
    %618 = vmatpush2.xpose.msra.mxu0 0.0
    %619 = vmatprep.subr.mxu0 0.0
    %620 = vmatpush2.xpose.msra.mxu0 0.0
    %621 = vmatprep.subr.mxu0 0.0
    %622 = vmatpush2.xpose.msra.mxu0 0.0
    %623 = vmatprep.mubr.f32.mxu0 0.0
    %624 = vmatmul.mubr.f32.gmra.mxu0 %v231
    %v625 = vpop.f32.mrf.mxu0
    %v626 = vadd.f32 0.0, %v625
    %v627 = vpop.f32.mrf.mxu0
    %628 = vmatprep.mubr.f32.mxu0 0.0
    %629 = vmatmul.mubr.f32.gmra.mxu0 %v237
    %v630 = vpop.f32.mrf.mxu0
    %v631 = vadd.f32 0.0, %v630
    %v632 = vpop.f32.mrf.mxu0
    %633 = vdwg.mxu0
    %vm634 = vcmask 130048
    %v635 = vsel %vm634, %v626, -inf
    %636 = vmax.xlane.f32.xlu0 %v635
    %v637 = vpop.xlane.xlu0 %636
    %v638 = vsel %vm634, %v631, -inf
    %639 = vmax.xlane.f32.xlu0 %v638
    %v640 = vpop.xlane.xlu0 %639
    %v641 = vsub.f32 %v626, %v637
    %v642 = vsub.f32 %v631, %v640
    %v643 = vmul.f32 %v641, 1.442695
    %v644 = vpow.pop %v643
    %v645 = vmul.f32 %v642, 1.442695
    %v646 = vpow.pop %v645
    %v647 = vsel %vm634, %v644, 0.0
    %648 = vadd.xlane.f32.xlu0 %v647
    %v649 = vpop.xlane.xlu0 %648
    %v650 = vsel %vm634, %v646, 0.0
    %651 = vadd.xlane.f32.xlu0 %v650
    %v652 = vpop.xlane.xlu0 %651
    %v653 = vrcp.pop %v649
    %v654 = vrcp.pop %v652
    %v655 = vmul.f32 %v644, %v653
    %v656 = vmul.f32 %v646, %v654
    %v658 = vsel %vm634, %v655, 0
    %v661 = vsel %vm634, %v656, 0
    %663 = vmatprep.subr.mxu0 0.0
    %664 = vmatpush1.msra.mxu0 0.0
    %665 = vmatprep.subr.mxu0 0.0
    %666 = vmatpush1.msra.mxu0 0.0
    %667 = vmatprep.subr.mxu0 0.0
    %668 = vmatpush1.msra.mxu0 0.0
    %669 = vmatprep.subr.mxu0 0.0
    %670 = vmatpush1.msra.mxu0 0.0
    %671 = vmatprep.subr.mxu0 0.0
    %672 = vmatpush1.msra.mxu0 0.0
    %673 = vmatprep.subr.mxu0 0.0
    %674 = vmatpush1.msra.mxu0 0.0
    %675 = vmatprep.subr.mxu0 0.0
    %676 = vmatpush1.msra.mxu0 0.0
    %677 = vmatprep.subr.mxu0 0.0
    %678 = vmatpush1.msra.mxu0 0.0
    %679 = vmatprep.subr.mxu0 0.0
    %680 = vmatpush1.msra.mxu0 0.0
    %681 = vmatprep.subr.mxu0 0.0
    %682 = vmatpush1.msra.mxu0 0.0
    %683 = vmatprep.subr.mxu0 0.0
    %684 = vmatpush1.msra.mxu0 0.0
    %685 = vmatprep.subr.mxu0 0.0
    %686 = vmatpush1.msra.mxu0 0.0
    %687 = vmatprep.subr.mxu0 0.0
    %688 = vmatpush1.msra.mxu0 0.0
    %689 = vmatprep.subr.mxu0 0.0
    %690 = vmatpush1.msra.mxu0 0.0
    %691 = vmatprep.subr.mxu0 0.0
    %692 = vmatpush1.msra.mxu0 %v543
    %693 = vmatprep.subr.mxu0 0.0
    %694 = vmatpush1.msra.mxu0 %v537
    %695 = vmatprep.subr.mxu0 0.0
    %696 = vmatpush2.msra.mxu0 0.0
    %697 = vmatprep.subr.mxu0 0.0
    %698 = vmatpush2.msra.mxu0 0.0
    %699 = vmatprep.subr.mxu0 0.0
    %700 = vmatpush2.msra.mxu0 0.0
    %701 = vmatprep.subr.mxu0 0.0
    %702 = vmatpush2.msra.mxu0 0.0
    %703 = vmatprep.subr.mxu0 0.0
    %704 = vmatpush2.msra.mxu0 0.0
    %705 = vmatprep.subr.mxu0 0.0
    %706 = vmatpush2.msra.mxu0 0.0
    %707 = vmatprep.subr.mxu0 0.0
    %708 = vmatpush2.msra.mxu0 0.0
    %709 = vmatprep.subr.mxu0 0.0
    %710 = vmatpush2.msra.mxu0 0.0
    %711 = vmatprep.subr.mxu0 0.0
    %712 = vmatpush2.msra.mxu0 0.0
    %713 = vmatprep.subr.mxu0 0.0
    %714 = vmatpush2.msra.mxu0 0.0
    %715 = vmatprep.subr.mxu0 0.0
    %716 = vmatpush2.msra.mxu0 0.0
    %717 = vmatprep.subr.mxu0 0.0
    %718 = vmatpush2.msra.mxu0 0.0
    %719 = vmatprep.subr.mxu0 0.0
    %720 = vmatpush2.msra.mxu0 0.0
    %721 = vmatprep.subr.mxu0 0.0
    %722 = vmatpush2.msra.mxu0 0.0
    %723 = vmatprep.subr.mxu0 0.0
    %724 = vmatpush2.msra.mxu0 0.0
    %725 = vmatprep.subr.mxu0 0.0
    %726 = vmatpush2.msra.mxu0 0.0
    %727 = vmatprep.mubr.f32.mxu0 0.0
    %728 = vmatmul.mubr.f32.gmra.mxu0 %v658
    %v729 = vpop.f32.mrf.mxu0
    %v730 = vadd.f32 0.0, %v729
    %v731 = vpop.f32.mrf.mxu0
    %732 = vmatprep.mubr.f32.mxu0 0.0
    %733 = vmatmul.mubr.f32.gmra.mxu0 %v661
    %v734 = vpop.f32.mrf.mxu0
    %v735 = vadd.f32 0.0, %v734
    %v736 = vpop.f32.mrf.mxu0
    %737 = vdwg.mxu0
    %738 = vst [vmem:[#allocation2] sm:$0xff] %v730
    %739 = vst [vmem:[#allocation2 + $0x10] sm:$0xff] %v735
    %740 = vmatprep.subr.mxu0 0.0
    %741 = vmatpush1.xpose.msra.mxu0 0.0
    %742 = vmatprep.subr.mxu0 0.0
    %743 = vmatpush1.xpose.msra.mxu0 0.0
    %744 = vmatprep.subr.mxu0 0.0
    %745 = vmatpush1.xpose.msra.mxu0 0.0
    %746 = vmatprep.subr.mxu0 0.0
    %747 = vmatpush1.xpose.msra.mxu0 0.0
    %748 = vmatprep.subr.mxu0 0.0
    %749 = vmatpush1.xpose.msra.mxu0 0.0
    %750 = vmatprep.subr.mxu0 0.0
    %751 = vmatpush1.xpose.msra.mxu0 0.0
    %752 = vmatprep.subr.mxu0 0.0
    %753 = vmatpush1.xpose.msra.mxu0 0.0
    %754 = vmatprep.subr.mxu0 0.0
    %755 = vmatpush1.xpose.msra.mxu0 0.0
    %756 = vmatprep.subr.mxu0 0.0
    %757 = vmatpush1.xpose.msra.mxu0 0.0
    %758 = vmatprep.subr.mxu0 0.0
    %759 = vmatpush1.xpose.msra.mxu0 0.0
    %760 = vmatprep.subr.mxu0 0.0
    %761 = vmatpush1.xpose.msra.mxu0 0.0
    %762 = vmatprep.subr.mxu0 0.0
    %763 = vmatpush1.xpose.msra.mxu0 0.0
    %764 = vmatprep.subr.mxu0 0.0
    %765 = vmatpush1.xpose.msra.mxu0 0.0
    %766 = vmatprep.subr.mxu0 0.0
    %767 = vmatpush1.xpose.msra.mxu0 0.0
    %768 = vmatprep.subr.mxu0 0.0
    %769 = vmatpush1.xpose.msra.mxu0 %v392
    %770 = vmatprep.subr.mxu0 0.0
    %771 = vmatpush1.xpose.msra.mxu0 %v386
    %772 = vmatprep.subr.mxu0 0.0
    %773 = vmatpush2.xpose.msra.mxu0 0.0
    %774 = vmatprep.subr.mxu0 0.0
    %775 = vmatpush2.xpose.msra.mxu0 0.0
    %776 = vmatprep.subr.mxu0 0.0
    %777 = vmatpush2.xpose.msra.mxu0 0.0
    %778 = vmatprep.subr.mxu0 0.0
    %779 = vmatpush2.xpose.msra.mxu0 0.0
    %780 = vmatprep.subr.mxu0 0.0
    %781 = vmatpush2.xpose.msra.mxu0 0.0
    %782 = vmatprep.subr.mxu0 0.0
    %783 = vmatpush2.xpose.msra.mxu0 0.0
    %784 = vmatprep.subr.mxu0 0.0
    %785 = vmatpush2.xpose.msra.mxu0 0.0
    %786 = vmatprep.subr.mxu0 0.0
    %787 = vmatpush2.xpose.msra.mxu0 0.0
    %788 = vmatprep.subr.mxu0 0.0
    %789 = vmatpush2.xpose.msra.mxu0 0.0
    %790 = vmatprep.subr.mxu0 0.0
    %791 = vmatpush2.xpose.msra.mxu0 0.0
    %792 = vmatprep.subr.mxu0 0.0
    %793 = vmatpush2.xpose.msra.mxu0 0.0
    %794 = vmatprep.subr.mxu0 0.0
    %795 = vmatpush2.xpose.msra.mxu0 0.0
    %796 = vmatprep.subr.mxu0 0.0
    %797 = vmatpush2.xpose.msra.mxu0 0.0
    %798 = vmatprep.subr.mxu0 0.0
    %799 = vmatpush2.xpose.msra.mxu0 0.0
    %800 = vmatprep.subr.mxu0 0.0
    %801 = vmatpush2.xpose.msra.mxu0 0.0
    %802 = vmatprep.subr.mxu0 0.0
    %803 = vmatpush2.xpose.msra.mxu0 0.0
    %804 = vmatprep.mubr.f32.mxu0 0.0
    %805 = vmatmul.mubr.f32.gmra.mxu0 %v233
    %v806 = vpop.f32.mrf.mxu0
    %v807 = vadd.f32 0.0, %v806
    %v808 = vpop.f32.mrf.mxu0
    %809 = vmatprep.mubr.f32.mxu0 0.0
    %810 = vmatmul.mubr.f32.gmra.mxu0 %v239
    %v811 = vpop.f32.mrf.mxu0
    %v812 = vadd.f32 0.0, %v811
    %v813 = vpop.f32.mrf.mxu0
    %814 = vdwg.mxu0
    %v815 = vsel %vm634, %v807, -inf
    %816 = vmax.xlane.f32.xlu0 %v815
    %v817 = vpop.xlane.xlu0 %816
    %v818 = vsel %vm634, %v812, -inf
    %819 = vmax.xlane.f32.xlu0 %v818
    %v820 = vpop.xlane.xlu0 %819
    %v821 = vsub.f32 %v807, %v817
    %v822 = vsub.f32 %v812, %v820
    %v823 = vmul.f32 %v821, 1.442695
    %v824 = vpow.pop %v823
    %v825 = vmul.f32 %v822, 1.442695
    %v826 = vpow.pop %v825
    %v827 = vsel %vm634, %v824, 0.0
    %828 = vadd.xlane.f32.xlu0 %v827
    %v829 = vpop.xlane.xlu0 %828
    %v830 = vsel %vm634, %v826, 0.0
    %831 = vadd.xlane.f32.xlu0 %v830
    %v832 = vpop.xlane.xlu0 %831
    %v833 = vrcp.pop %v829
    %v834 = vrcp.pop %v832
    %v835 = vmul.f32 %v824, %v833
    %v836 = vmul.f32 %v826, %v834
    %v838 = vsel %vm634, %v835, 0
    %v841 = vsel %vm634, %v836, 0
    %843 = vmatprep.subr.mxu0 0.0
    %844 = vmatpush1.msra.mxu0 0.0
    %845 = vmatprep.subr.mxu0 0.0
    %846 = vmatpush1.msra.mxu0 0.0
    %847 = vmatprep.subr.mxu0 0.0
    %848 = vmatpush1.msra.mxu0 0.0
    %849 = vmatprep.subr.mxu0 0.0
    %850 = vmatpush1.msra.mxu0 0.0
    %851 = vmatprep.subr.mxu0 0.0
    %852 = vmatpush1.msra.mxu0 0.0
    %853 = vmatprep.subr.mxu0 0.0
    %854 = vmatpush1.msra.mxu0 0.0
    %855 = vmatprep.subr.mxu0 0.0
    %856 = vmatpush1.msra.mxu0 0.0
    %857 = vmatprep.subr.mxu0 0.0
    %858 = vmatpush1.msra.mxu0 0.0
    %859 = vmatprep.subr.mxu0 0.0
    %860 = vmatpush1.msra.mxu0 0.0
    %861 = vmatprep.subr.mxu0 0.0
    %862 = vmatpush1.msra.mxu0 0.0
    %863 = vmatprep.subr.mxu0 0.0
    %864 = vmatpush1.msra.mxu0 0.0
    %865 = vmatprep.subr.mxu0 0.0
    %866 = vmatpush1.msra.mxu0 0.0
    %867 = vmatprep.subr.mxu0 0.0
    %868 = vmatpush1.msra.mxu0 0.0
    %869 = vmatprep.subr.mxu0 0.0
    %870 = vmatpush1.msra.mxu0 0.0
    %871 = vmatprep.subr.mxu0 0.0
    %872 = vmatpush1.msra.mxu0 %v545
    %873 = vmatprep.subr.mxu0 0.0
    %874 = vmatpush1.msra.mxu0 %v539
    %875 = vmatprep.subr.mxu0 0.0
    %876 = vmatpush2.msra.mxu0 0.0
    %877 = vmatprep.subr.mxu0 0.0
    %878 = vmatpush2.msra.mxu0 0.0
    %879 = vmatprep.subr.mxu0 0.0
    %880 = vmatpush2.msra.mxu0 0.0
    %881 = vmatprep.subr.mxu0 0.0
    %882 = vmatpush2.msra.mxu0 0.0
    %883 = vmatprep.subr.mxu0 0.0
    %884 = vmatpush2.msra.mxu0 0.0
    %885 = vmatprep.subr.mxu0 0.0
    %886 = vmatpush2.msra.mxu0 0.0
    %887 = vmatprep.subr.mxu0 0.0
    %888 = vmatpush2.msra.mxu0 0.0
    %889 = vmatprep.subr.mxu0 0.0
    %890 = vmatpush2.msra.mxu0 0.0
    %891 = vmatprep.subr.mxu0 0.0
    %892 = vmatpush2.msra.mxu0 0.0
    %893 = vmatprep.subr.mxu0 0.0
    %894 = vmatpush2.msra.mxu0 0.0
    %895 = vmatprep.subr.mxu0 0.0
    %896 = vmatpush2.msra.mxu0 0.0
    %897 = vmatprep.subr.mxu0 0.0
    %898 = vmatpush2.msra.mxu0 0.0
    %899 = vmatprep.subr.mxu0 0.0
    %900 = vmatpush2.msra.mxu0 0.0
    %901 = vmatprep.subr.mxu0 0.0
    %902 = vmatpush2.msra.mxu0 0.0
    %903 = vmatprep.subr.mxu0 0.0
    %904 = vmatpush2.msra.mxu0 0.0
    %905 = vmatprep.subr.mxu0 0.0
    %906 = vmatpush2.msra.mxu0 0.0
    %907 = vmatprep.mubr.f32.mxu0 0.0
    %908 = vmatmul.mubr.f32.gmra.mxu0 %v838
    %v909 = vpop.f32.mrf.mxu0
    %v910 = vadd.f32 0.0, %v909
    %v911 = vpop.f32.mrf.mxu0
    %912 = vmatprep.mubr.f32.mxu0 0.0
    %913 = vmatmul.mubr.f32.gmra.mxu0 %v841
    %v914 = vpop.f32.mrf.mxu0
    %v915 = vadd.f32 0.0, %v914
    %v916 = vpop.f32.mrf.mxu0
    %917 = vdwg.mxu0
    %918 = vst [vmem:[#allocation2 + $0x8] sm:$0xff] %v910
    %919 = vst [vmem:[#allocation2 + $0x18] sm:$0xff] %v915
    %920 = vmatprep.subr.mxu0 0.0
    %921 = vmatpush1.xpose.msra.mxu0 0.0
    %922 = vmatprep.subr.mxu0 0.0
    %923 = vmatpush1.xpose.msra.mxu0 0.0
    %924 = vmatprep.subr.mxu0 0.0
    %925 = vmatpush1.xpose.msra.mxu0 0.0
    %926 = vmatprep.subr.mxu0 0.0
    %927 = vmatpush1.xpose.msra.mxu0 0.0
    %928 = vmatprep.subr.mxu0 0.0
    %929 = vmatpush1.xpose.msra.mxu0 0.0
    %930 = vmatprep.subr.mxu0 0.0
    %931 = vmatpush1.xpose.msra.mxu0 0.0
    %932 = vmatprep.subr.mxu0 0.0
    %933 = vmatpush1.xpose.msra.mxu0 0.0
    %934 = vmatprep.subr.mxu0 0.0
    %935 = vmatpush1.xpose.msra.mxu0 0.0
    %936 = vmatprep.subr.mxu0 0.0
    %937 = vmatpush1.xpose.msra.mxu0 0.0
    %938 = vmatprep.subr.mxu0 0.0
    %939 = vmatpush1.xpose.msra.mxu0 0.0
    %940 = vmatprep.subr.mxu0 0.0
    %941 = vmatpush1.xpose.msra.mxu0 0.0
    %942 = vmatprep.subr.mxu0 0.0
    %943 = vmatpush1.xpose.msra.mxu0 0.0
    %944 = vmatprep.subr.mxu0 0.0
    %945 = vmatpush1.xpose.msra.mxu0 0.0
    %946 = vmatprep.subr.mxu0 0.0
    %947 = vmatpush1.xpose.msra.mxu0 0.0
    %948 = vmatprep.subr.mxu0 0.0
    %949 = vmatpush1.xpose.msra.mxu0 %v402
    %950 = vmatprep.subr.mxu0 0.0
    %951 = vmatpush1.xpose.msra.mxu0 %v396
    %952 = vmatprep.subr.mxu0 0.0
    %953 = vmatpush2.xpose.msra.mxu0 0.0
    %954 = vmatprep.subr.mxu0 0.0
    %955 = vmatpush2.xpose.msra.mxu0 0.0
    %956 = vmatprep.subr.mxu0 0.0
    %957 = vmatpush2.xpose.msra.mxu0 0.0
    %958 = vmatprep.subr.mxu0 0.0
    %959 = vmatpush2.xpose.msra.mxu0 0.0
    %960 = vmatprep.subr.mxu0 0.0
    %961 = vmatpush2.xpose.msra.mxu0 0.0
    %962 = vmatprep.subr.mxu0 0.0
    %963 = vmatpush2.xpose.msra.mxu0 0.0
    %964 = vmatprep.subr.mxu0 0.0
    %965 = vmatpush2.xpose.msra.mxu0 0.0
    %966 = vmatprep.subr.mxu0 0.0
    %967 = vmatpush2.xpose.msra.mxu0 0.0
    %968 = vmatprep.subr.mxu0 0.0
    %969 = vmatpush2.xpose.msra.mxu0 0.0
    %970 = vmatprep.subr.mxu0 0.0
    %971 = vmatpush2.xpose.msra.mxu0 0.0
    %972 = vmatprep.subr.mxu0 0.0
    %973 = vmatpush2.xpose.msra.mxu0 0.0
    %974 = vmatprep.subr.mxu0 0.0
    %975 = vmatpush2.xpose.msra.mxu0 0.0
    %976 = vmatprep.subr.mxu0 0.0
    %977 = vmatpush2.xpose.msra.mxu0 0.0
    %978 = vmatprep.subr.mxu0 0.0
    %979 = vmatpush2.xpose.msra.mxu0 0.0
    %980 = vmatprep.subr.mxu0 0.0
    %981 = vmatpush2.xpose.msra.mxu0 0.0
    %982 = vmatprep.subr.mxu0 0.0
    %983 = vmatpush2.xpose.msra.mxu0 0.0
    %984 = vmatprep.mubr.f32.mxu0 0.0
    %985 = vmatmul.mubr.f32.gmra.mxu0 %v243
    %v986 = vpop.f32.mrf.mxu0
    %v987 = vadd.f32 0.0, %v986
    %v988 = vpop.f32.mrf.mxu0
    %989 = vmatprep.mubr.f32.mxu0 0.0
    %990 = vmatmul.mubr.f32.gmra.mxu0 %v249
    %v991 = vpop.f32.mrf.mxu0
    %v992 = vadd.f32 0.0, %v991
    %v993 = vpop.f32.mrf.mxu0
    %994 = vdwg.mxu0
    %v995 = vsel %vm634, %v987, -inf
    %996 = vmax.xlane.f32.xlu0 %v995
    %v997 = vpop.xlane.xlu0 %996
    %v998 = vsel %vm634, %v992, -inf
    %999 = vmax.xlane.f32.xlu0 %v998
    %v1000 = vpop.xlane.xlu0 %999
    %v1001 = vsub.f32 %v987, %v997
    %v1002 = vsub.f32 %v992, %v1000
    %v1003 = vmul.f32 %v1001, 1.442695
    %v1004 = vpow.pop %v1003
    %v1005 = vmul.f32 %v1002, 1.442695
    %v1006 = vpow.pop %v1005
    %v1007 = vsel %vm634, %v1004, 0.0
    %1008 = vadd.xlane.f32.xlu0 %v1007
    %v1009 = vpop.xlane.xlu0 %1008
    %v1010 = vsel %vm634, %v1006, 0.0
    %1011 = vadd.xlane.f32.xlu0 %v1010
    %v1012 = vpop.xlane.xlu0 %1011
    %v1013 = vrcp.pop %v1009
    %v1014 = vrcp.pop %v1012
    %v1015 = vmul.f32 %v1004, %v1013
    %v1016 = vmul.f32 %v1006, %v1014
    %v1018 = vsel %vm634, %v1015, 0
    %v1021 = vsel %vm634, %v1016, 0
    %1023 = vmatprep.subr.mxu0 0.0
    %1024 = vmatpush1.msra.mxu0 0.0
    %1025 = vmatprep.subr.mxu0 0.0
    %1026 = vmatpush1.msra.mxu0 0.0
    %1027 = vmatprep.subr.mxu0 0.0
    %1028 = vmatpush1.msra.mxu0 0.0
    %1029 = vmatprep.subr.mxu0 0.0
    %1030 = vmatpush1.msra.mxu0 0.0
    %1031 = vmatprep.subr.mxu0 0.0
    %1032 = vmatpush1.msra.mxu0 0.0
    %1033 = vmatprep.subr.mxu0 0.0
    %1034 = vmatpush1.msra.mxu0 0.0
    %1035 = vmatprep.subr.mxu0 0.0
    %1036 = vmatpush1.msra.mxu0 0.0
    %1037 = vmatprep.subr.mxu0 0.0
    %1038 = vmatpush1.msra.mxu0 0.0
    %1039 = vmatprep.subr.mxu0 0.0
    %1040 = vmatpush1.msra.mxu0 0.0
    %1041 = vmatprep.subr.mxu0 0.0
    %1042 = vmatpush1.msra.mxu0 0.0
    %1043 = vmatprep.subr.mxu0 0.0
    %1044 = vmatpush1.msra.mxu0 0.0
    %1045 = vmatprep.subr.mxu0 0.0
    %1046 = vmatpush1.msra.mxu0 0.0
    %1047 = vmatprep.subr.mxu0 0.0
    %1048 = vmatpush1.msra.mxu0 0.0
    %1049 = vmatprep.subr.mxu0 0.0
    %1050 = vmatpush1.msra.mxu0 0.0
    %1051 = vmatprep.subr.mxu0 0.0
    %1052 = vmatpush1.msra.mxu0 %v555
    %1053 = vmatprep.subr.mxu0 0.0
    %1054 = vmatpush1.msra.mxu0 %v549
    %1055 = vmatprep.subr.mxu0 0.0
    %1056 = vmatpush2.msra.mxu0 0.0
    %1057 = vmatprep.subr.mxu0 0.0
    %1058 = vmatpush2.msra.mxu0 0.0
    %1059 = vmatprep.subr.mxu0 0.0
    %1060 = vmatpush2.msra.mxu0 0.0
    %1061 = vmatprep.subr.mxu0 0.0
    %1062 = vmatpush2.msra.mxu0 0.0
    %1063 = vmatprep.subr.mxu0 0.0
    %1064 = vmatpush2.msra.mxu0 0.0
    %1065 = vmatprep.subr.mxu0 0.0
    %1066 = vmatpush2.msra.mxu0 0.0
    %1067 = vmatprep.subr.mxu0 0.0
    %1068 = vmatpush2.msra.mxu0 0.0
    %1069 = vmatprep.subr.mxu0 0.0
    %1070 = vmatpush2.msra.mxu0 0.0
    %1071 = vmatprep.subr.mxu0 0.0
    %1072 = vmatpush2.msra.mxu0 0.0
    %1073 = vmatprep.subr.mxu0 0.0
    %1074 = vmatpush2.msra.mxu0 0.0
    %1075 = vmatprep.subr.mxu0 0.0
    %1076 = vmatpush2.msra.mxu0 0.0
    %1077 = vmatprep.subr.mxu0 0.0
    %1078 = vmatpush2.msra.mxu0 0.0
    %1079 = vmatprep.subr.mxu0 0.0
    %1080 = vmatpush2.msra.mxu0 0.0
    %1081 = vmatprep.subr.mxu0 0.0
    %1082 = vmatpush2.msra.mxu0 0.0
    %1083 = vmatprep.subr.mxu0 0.0
    %1084 = vmatpush2.msra.mxu0 0.0
    %1085 = vmatprep.subr.mxu0 0.0
    %1086 = vmatpush2.msra.mxu0 0.0
    %1087 = vmatprep.mubr.f32.mxu0 0.0
    %1088 = vmatmul.mubr.f32.gmra.mxu0 %v1018
    %v1089 = vpop.f32.mrf.mxu0
    %v1090 = vadd.f32 0.0, %v1089
    %v1091 = vpop.f32.mrf.mxu0
    %1092 = vmatprep.mubr.f32.mxu0 0.0
    %1093 = vmatmul.mubr.f32.gmra.mxu0 %v1021
    %v1094 = vpop.f32.mrf.mxu0
    %v1095 = vadd.f32 0.0, %v1094
    %v1096 = vpop.f32.mrf.mxu0
    %1097 = vdwg.mxu0
    %1098 = vst [vmem:[#allocation2 + $0x20] sm:$0xff] %v1090
    %1099 = vst [vmem:[#allocation2 + $0x30] sm:$0xff] %v1095
    %1100 = vmatprep.subr.mxu0 0.0
    %1101 = vmatpush1.xpose.msra.mxu0 0.0
    %1102 = vmatprep.subr.mxu0 0.0
    %1103 = vmatpush1.xpose.msra.mxu0 0.0
    %1104 = vmatprep.subr.mxu0 0.0
    %1105 = vmatpush1.xpose.msra.mxu0 0.0
    %1106 = vmatprep.subr.mxu0 0.0
    %1107 = vmatpush1.xpose.msra.mxu0 0.0
    %1108 = vmatprep.subr.mxu0 0.0
    %1109 = vmatpush1.xpose.msra.mxu0 0.0
    %1110 = vmatprep.subr.mxu0 0.0
    %1111 = vmatpush1.xpose.msra.mxu0 0.0
    %1112 = vmatprep.subr.mxu0 0.0
    %1113 = vmatpush1.xpose.msra.mxu0 0.0
    %1114 = vmatprep.subr.mxu0 0.0
    %1115 = vmatpush1.xpose.msra.mxu0 0.0
    %1116 = vmatprep.subr.mxu0 0.0
    %1117 = vmatpush1.xpose.msra.mxu0 0.0
    %1118 = vmatprep.subr.mxu0 0.0
    %1119 = vmatpush1.xpose.msra.mxu0 0.0
    %1120 = vmatprep.subr.mxu0 0.0
    %1121 = vmatpush1.xpose.msra.mxu0 0.0
    %1122 = vmatprep.subr.mxu0 0.0
    %1123 = vmatpush1.xpose.msra.mxu0 0.0
    %1124 = vmatprep.subr.mxu0 0.0
    %1125 = vmatpush1.xpose.msra.mxu0 0.0
    %1126 = vmatprep.subr.mxu0 0.0
    %1127 = vmatpush1.xpose.msra.mxu0 0.0
    %1128 = vmatprep.subr.mxu0 0.0
    %1129 = vmatpush1.xpose.msra.mxu0 %v404
    %1130 = vmatprep.subr.mxu0 0.0
    %1131 = vmatpush1.xpose.msra.mxu0 %v398
    %1132 = vmatprep.subr.mxu0 0.0
    %1133 = vmatpush2.xpose.msra.mxu0 0.0
    %1134 = vmatprep.subr.mxu0 0.0
    %1135 = vmatpush2.xpose.msra.mxu0 0.0
    %1136 = vmatprep.subr.mxu0 0.0
    %1137 = vmatpush2.xpose.msra.mxu0 0.0
    %1138 = vmatprep.subr.mxu0 0.0
    %1139 = vmatpush2.xpose.msra.mxu0 0.0
    %1140 = vmatprep.subr.mxu0 0.0
    %1141 = vmatpush2.xpose.msra.mxu0 0.0
    %1142 = vmatprep.subr.mxu0 0.0
    %1143 = vmatpush2.xpose.msra.mxu0 0.0
    %1144 = vmatprep.subr.mxu0 0.0
    %1145 = vmatpush2.xpose.msra.mxu0 0.0
    %1146 = vmatprep.subr.mxu0 0.0
    %1147 = vmatpush2.xpose.msra.mxu0 0.0
    %1148 = vmatprep.subr.mxu0 0.0
    %1149 = vmatpush2.xpose.msra.mxu0 0.0
    %1150 = vmatprep.subr.mxu0 0.0
    %1151 = vmatpush2.xpose.msra.mxu0 0.0
    %1152 = vmatprep.subr.mxu0 0.0
    %1153 = vmatpush2.xpose.msra.mxu0 0.0
    %1154 = vmatprep.subr.mxu0 0.0
    %1155 = vmatpush2.xpose.msra.mxu0 0.0
    %1156 = vmatprep.subr.mxu0 0.0
    %1157 = vmatpush2.xpose.msra.mxu0 0.0
    %1158 = vmatprep.subr.mxu0 0.0
    %1159 = vmatpush2.xpose.msra.mxu0 0.0
    %1160 = vmatprep.subr.mxu0 0.0
    %1161 = vmatpush2.xpose.msra.mxu0 0.0
    %1162 = vmatprep.subr.mxu0 0.0
    %1163 = vmatpush2.xpose.msra.mxu0 0.0
    %1164 = vmatprep.mubr.f32.mxu0 0.0
    %1165 = vmatmul.mubr.f32.gmra.mxu0 %v245
    %v1166 = vpop.f32.mrf.mxu0
    %v1167 = vadd.f32 0.0, %v1166
    %v1168 = vpop.f32.mrf.mxu0
    %1169 = vmatprep.mubr.f32.mxu0 0.0
    %1170 = vmatmul.mubr.f32.gmra.mxu0 %v251
    %v1171 = vpop.f32.mrf.mxu0
    %v1172 = vadd.f32 0.0, %v1171
    %v1173 = vpop.f32.mrf.mxu0
    %1174 = vdwg.mxu0
    %v1175 = vsel %vm634, %v1167, -inf
    %1176 = vmax.xlane.f32.xlu0 %v1175
    %v1177 = vpop.xlane.xlu0 %1176
    %v1178 = vsel %vm634, %v1172, -inf
    %1179 = vmax.xlane.f32.xlu0 %v1178
    %v1180 = vpop.xlane.xlu0 %1179
    %v1181 = vsub.f32 %v1167, %v1177
    %v1182 = vsub.f32 %v1172, %v1180
    %v1183 = vmul.f32 %v1181, 1.442695
    %v1184 = vpow.pop %v1183
    %v1185 = vmul.f32 %v1182, 1.442695
    %v1186 = vpow.pop %v1185
    %v1187 = vsel %vm634, %v1184, 0.0
    %1188 = vadd.xlane.f32.xlu0 %v1187
    %v1189 = vpop.xlane.xlu0 %1188
    %v1190 = vsel %vm634, %v1186, 0.0
    %1191 = vadd.xlane.f32.xlu0 %v1190
    %v1192 = vpop.xlane.xlu0 %1191
    %v1193 = vrcp.pop %v1189
    %v1194 = vrcp.pop %v1192
    %v1195 = vmul.f32 %v1184, %v1193
    %v1196 = vmul.f32 %v1186, %v1194
    %v1198 = vsel %vm634, %v1195, 0
    %v1201 = vsel %vm634, %v1196, 0
    %1203 = vmatprep.subr.mxu0 0.0
    %1204 = vmatpush1.msra.mxu0 0.0
    %1205 = vmatprep.subr.mxu0 0.0
    %1206 = vmatpush1.msra.mxu0 0.0
    %1207 = vmatprep.subr.mxu0 0.0
    %1208 = vmatpush1.msra.mxu0 0.0
    %1209 = vmatprep.subr.mxu0 0.0
    %1210 = vmatpush1.msra.mxu0 0.0
    %1211 = vmatprep.subr.mxu0 0.0
    %1212 = vmatpush1.msra.mxu0 0.0
    %1213 = vmatprep.subr.mxu0 0.0
    %1214 = vmatpush1.msra.mxu0 0.0
    %1215 = vmatprep.subr.mxu0 0.0
    %1216 = vmatpush1.msra.mxu0 0.0
    %1217 = vmatprep.subr.mxu0 0.0
    %1218 = vmatpush1.msra.mxu0 0.0
    %1219 = vmatprep.subr.mxu0 0.0
    %1220 = vmatpush1.msra.mxu0 0.0
    %1221 = vmatprep.subr.mxu0 0.0
    %1222 = vmatpush1.msra.mxu0 0.0
    %1223 = vmatprep.subr.mxu0 0.0
    %1224 = vmatpush1.msra.mxu0 0.0
    %1225 = vmatprep.subr.mxu0 0.0
    %1226 = vmatpush1.msra.mxu0 0.0
    %1227 = vmatprep.subr.mxu0 0.0
    %1228 = vmatpush1.msra.mxu0 0.0
    %1229 = vmatprep.subr.mxu0 0.0
    %1230 = vmatpush1.msra.mxu0 0.0
    %1231 = vmatprep.subr.mxu0 0.0
    %1232 = vmatpush1.msra.mxu0 %v557
    %1233 = vmatprep.subr.mxu0 0.0
    %1234 = vmatpush1.msra.mxu0 %v551
    %1235 = vmatprep.subr.mxu0 0.0
    %1236 = vmatpush2.msra.mxu0 0.0
    %1237 = vmatprep.subr.mxu0 0.0
    %1238 = vmatpush2.msra.mxu0 0.0
    %1239 = vmatprep.subr.mxu0 0.0
    %1240 = vmatpush2.msra.mxu0 0.0
    %1241 = vmatprep.subr.mxu0 0.0
    %1242 = vmatpush2.msra.mxu0 0.0
    %1243 = vmatprep.subr.mxu0 0.0
    %1244 = vmatpush2.msra.mxu0 0.0
    %1245 = vmatprep.subr.mxu0 0.0
    %1246 = vmatpush2.msra.mxu0 0.0
    %1247 = vmatprep.subr.mxu0 0.0
    %1248 = vmatpush2.msra.mxu0 0.0
    %1249 = vmatprep.subr.mxu0 0.0
    %1250 = vmatpush2.msra.mxu0 0.0
    %1251 = vmatprep.subr.mxu0 0.0
    %1252 = vmatpush2.msra.mxu0 0.0
    %1253 = vmatprep.subr.mxu0 0.0
    %1254 = vmatpush2.msra.mxu0 0.0
    %1255 = vmatprep.subr.mxu0 0.0
    %1256 = vmatpush2.msra.mxu0 0.0
    %1257 = vmatprep.subr.mxu0 0.0
    %1258 = vmatpush2.msra.mxu0 0.0
    %1259 = vmatprep.subr.mxu0 0.0
    %1260 = vmatpush2.msra.mxu0 0.0
    %1261 = vmatprep.subr.mxu0 0.0
    %1262 = vmatpush2.msra.mxu0 0.0
    %1263 = vmatprep.subr.mxu0 0.0
    %1264 = vmatpush2.msra.mxu0 0.0
    %1265 = vmatprep.subr.mxu0 0.0
    %1266 = vmatpush2.msra.mxu0 0.0
    %1267 = vmatprep.mubr.f32.mxu0 0.0
    %1268 = vmatmul.mubr.f32.gmra.mxu0 %v1198
    %v1269 = vpop.f32.mrf.mxu0
    %v1270 = vadd.f32 0.0, %v1269
    %v1271 = vpop.f32.mrf.mxu0
    %1272 = vmatprep.mubr.f32.mxu0 0.0
    %1273 = vmatmul.mubr.f32.gmra.mxu0 %v1201
    %v1274 = vpop.f32.mrf.mxu0
    %v1275 = vadd.f32 0.0, %v1274
    %v1276 = vpop.f32.mrf.mxu0
    %1277 = vdwg.mxu0
    %1278 = vst [vmem:[#allocation2 + $0x28] sm:$0xff] %v1270
    %1279 = vst [vmem:[#allocation2 + $0x38] sm:$0xff] %v1275
    %v1280 = vld [vmem:[#allocation2] sm:$0xff]
    %v1281 = vld [vmem:[#allocation2 + $0x8] sm:$0xff]
    %v1282 = vld [vmem:[#allocation2 + $0x10] sm:$0xff]
    %v1283 = vld [vmem:[#allocation2 + $0x18] sm:$0xff]
    %v1284 = vld [vmem:[#allocation2 + $0x20] sm:$0xff]
    %v1285 = vld [vmem:[#allocation2 + $0x28] sm:$0xff]
    %v1286 = vld [vmem:[#allocation2 + $0x30] sm:$0xff]
    %v1287 = vld [vmem:[#allocation2 + $0x38] sm:$0xff]
    %v1288 = vld [vmem:[#allocation11] sm:$0xff]
    %v1289 = vld [vmem:[#allocation11 + $0x8] sm:$0xff]
    %v1290 = vld [vmem:[#allocation11 + $0x10] sm:$0xff]
    %v1291 = vld [vmem:[#allocation11 + $0x18] sm:$0xff]
    %v1292 = vld [vmem:[#allocation11 + $0x20] sm:$0xff]
    %v1293 = vld [vmem:[#allocation11 + $0x28] sm:$0xff]
    %v1294 = vld [vmem:[#allocation11 + $0x30] sm:$0xff]
    %v1295 = vld [vmem:[#allocation11 + $0x38] sm:$0xff]
    %v1296 = vld [vmem:[#allocation11 + $0x40] sm:$0xff]
    %v1297 = vld [vmem:[#allocation11 + $0x48] sm:$0xff]
    %v1298 = vld [vmem:[#allocation11 + $0x50] sm:$0xff]
    %v1299 = vld [vmem:[#allocation11 + $0x58] sm:$0xff]
    %v1300 = vld [vmem:[#allocation11 + $0x60] sm:$0xff]
    %v1301 = vld [vmem:[#allocation11 + $0x68] sm:$0xff]
    %v1302 = vld [vmem:[#allocation11 + $0x70] sm:$0xff]
    %v1303 = vld [vmem:[#allocation11 + $0x78] sm:$0xff]
    %v1304 = vld [vmem:[#allocation11 + $0x80] sm:$0xff]
    %v1305 = vld [vmem:[#allocation11 + $0x88] sm:$0xff]
    %v1306 = vld [vmem:[#allocation11 + $0x90] sm:$0xff]
    %v1307 = vld [vmem:[#allocation11 + $0x98] sm:$0xff]
    %v1308 = vld [vmem:[#allocation11 + $0xa0] sm:$0xff]
    %v1309 = vld [vmem:[#allocation11 + $0xa8] sm:$0xff]
    %v1310 = vld [vmem:[#allocation11 + $0xb0] sm:$0xff]
    %v1311 = vld [vmem:[#allocation11 + $0xb8] sm:$0xff]
    %v1312 = vld [vmem:[#allocation11 + $0xc0] sm:$0xff]
    %v1313 = vld [vmem:[#allocation11 + $0xc8] sm:$0xff]
    %v1314 = vld [vmem:[#allocation11 + $0xd0] sm:$0xff]
    %v1315 = vld [vmem:[#allocation11 + $0xd8] sm:$0xff]
    %v1316 = vld [vmem:[#allocation11 + $0xe0] sm:$0xff]
    %v1317 = vld [vmem:[#allocation11 + $0xe8] sm:$0xff]
    %v1318 = vld [vmem:[#allocation11 + $0xf0] sm:$0xff]
    %v1319 = vld [vmem:[#allocation11 + $0xf8] sm:$0xff]
    %v1320 = vld [vmem:[#allocation11 + $0x100] sm:$0xff]
    %v1321 = vld [vmem:[#allocation11 + $0x108] sm:$0xff]
    %v1322 = vld [vmem:[#allocation11 + $0x110] sm:$0xff]
    %v1323 = vld [vmem:[#allocation11 + $0x118] sm:$0xff]
    %v1324 = vld [vmem:[#allocation11 + $0x120] sm:$0xff]
    %v1325 = vld [vmem:[#allocation11 + $0x128] sm:$0xff]
    %v1326 = vld [vmem:[#allocation11 + $0x130] sm:$0xff]
    %v1327 = vld [vmem:[#allocation11 + $0x138] sm:$0xff]
    %v1328 = vld [vmem:[#allocation11 + $0x140] sm:$0xff]
    %v1329 = vld [vmem:[#allocation11 + $0x148] sm:$0xff]
    %v1330 = vld [vmem:[#allocation11 + $0x150] sm:$0xff]
    %v1331 = vld [vmem:[#allocation11 + $0x158] sm:$0xff]
    %v1332 = vld [vmem:[#allocation11 + $0x160] sm:$0xff]
    %v1333 = vld [vmem:[#allocation11 + $0x168] sm:$0xff]
    %v1334 = vld [vmem:[#allocation11 + $0x170] sm:$0xff]
    %v1335 = vld [vmem:[#allocation11 + $0x178] sm:$0xff]
    %v1336 = vld [vmem:[#allocation11 + $0x180] sm:$0xff]
    %v1337 = vld [vmem:[#allocation11 + $0x188] sm:$0xff]
    %v1338 = vld [vmem:[#allocation11 + $0x190] sm:$0xff]
    %v1339 = vld [vmem:[#allocation11 + $0x198] sm:$0xff]
    %v1340 = vld [vmem:[#allocation11 + $0x1a0] sm:$0xff]
    %v1341 = vld [vmem:[#allocation11 + $0x1a8] sm:$0xff]
    %v1342 = vld [vmem:[#allocation11 + $0x1b0] sm:$0xff]
    %v1343 = vld [vmem:[#allocation11 + $0x1b8] sm:$0xff]
    %v1344 = vld [vmem:[#allocation11 + $0x1c0] sm:$0xff]
    %v1345 = vld [vmem:[#allocation11 + $0x1c8] sm:$0xff]
    %v1346 = vld [vmem:[#allocation11 + $0x1d0] sm:$0xff]
    %v1347 = vld [vmem:[#allocation11 + $0x1d8] sm:$0xff]
    %v1348 = vld [vmem:[#allocation11 + $0x1e0] sm:$0xff]
    %v1349 = vld [vmem:[#allocation11 + $0x1e8] sm:$0xff]
    %v1350 = vld [vmem:[#allocation11 + $0x1f0] sm:$0xff]
    %v1351 = vld [vmem:[#allocation11 + $0x1f8] sm:$0xff]
    %v1352 = vld [vmem:[%s5] sm:$0x3]
    %v1354 = vlaneseq
    %v1355 = vshrl.u32 %v1354, 7
    %v1356 = vsub.s32 0, %v1355
    %v1357 = vrot.slane %v1352, %v1356
    %v1358 = vlaneseq
    %v1359 = vshrl.u32 %v1358, 7
    %v1360 = vsub.s32 1, %v1359
    %v1361 = vrot.slane %v1352, %v1360
    %1364 = vmatprep.subr.mxu0 %v1319
    %1365 = vmatpush1.msra.mxu0 %v1318
    %1366 = vmatprep.subr.mxu0 %v1317
    %1367 = vmatpush1.msra.mxu0 %v1316
    %1368 = vmatprep.subr.mxu0 %v1315
    %1369 = vmatpush1.msra.mxu0 %v1314
    %1370 = vmatprep.subr.mxu0 %v1313
    %1371 = vmatpush1.msra.mxu0 %v1312
    %1372 = vmatprep.subr.mxu0 %v1311
    %1373 = vmatpush1.msra.mxu0 %v1310
    %1374 = vmatprep.subr.mxu0 %v1309
    %1375 = vmatpush1.msra.mxu0 %v1308
    %1376 = vmatprep.subr.mxu0 %v1307
    %1377 = vmatpush1.msra.mxu0 %v1306
    %1378 = vmatprep.subr.mxu0 %v1305
    %1379 = vmatpush1.msra.mxu0 %v1304
    %1380 = vmatprep.subr.mxu0 %v1303
    %1381 = vmatpush1.msra.mxu0 %v1302
    %1382 = vmatprep.subr.mxu0 %v1301
    %1383 = vmatpush1.msra.mxu0 %v1300
    %1384 = vmatprep.subr.mxu0 %v1299
    %1385 = vmatpush1.msra.mxu0 %v1298
    %1386 = vmatprep.subr.mxu0 %v1297
    %1387 = vmatpush1.msra.mxu0 %v1296
    %1388 = vmatprep.subr.mxu0 %v1295
    %1389 = vmatpush1.msra.mxu0 %v1294
    %1390 = vmatprep.subr.mxu0 %v1293
    %1391 = vmatpush1.msra.mxu0 %v1292
    %1392 = vmatprep.subr.mxu0 %v1291
    %1393 = vmatpush1.msra.mxu0 %v1290
    %1394 = vmatprep.subr.mxu0 %v1289
    %1395 = vmatpush1.msra.mxu0 %v1288
    %1396 = vmatprep.subr.mxu0 %v1351
    %1397 = vmatpush2.msra.mxu0 %v1350
    %1398 = vmatprep.subr.mxu0 %v1349
    %1399 = vmatpush2.msra.mxu0 %v1348
    %1400 = vmatprep.subr.mxu0 %v1347
    %1401 = vmatpush2.msra.mxu0 %v1346
    %1402 = vmatprep.subr.mxu0 %v1345
    %1403 = vmatpush2.msra.mxu0 %v1344
    %1404 = vmatprep.subr.mxu0 %v1343
    %1405 = vmatpush2.msra.mxu0 %v1342
    %1406 = vmatprep.subr.mxu0 %v1341
    %1407 = vmatpush2.msra.mxu0 %v1340
    %1408 = vmatprep.subr.mxu0 %v1339
    %1409 = vmatpush2.msra.mxu0 %v1338
    %1410 = vmatprep.subr.mxu0 %v1337
    %1411 = vmatpush2.msra.mxu0 %v1336
    %1412 = vmatprep.subr.mxu0 %v1335
    %1413 = vmatpush2.msra.mxu0 %v1334
    %1414 = vmatprep.subr.mxu0 %v1333
    %1415 = vmatpush2.msra.mxu0 %v1332
    %1416 = vmatprep.subr.mxu0 %v1331
    %1417 = vmatpush2.msra.mxu0 %v1330
    %1418 = vmatprep.subr.mxu0 %v1329
    %1419 = vmatpush2.msra.mxu0 %v1328
    %1420 = vmatprep.subr.mxu0 %v1327
    %1421 = vmatpush2.msra.mxu0 %v1326
    %1422 = vmatprep.subr.mxu0 %v1325
    %1423 = vmatpush2.msra.mxu0 %v1324
    %1424 = vmatprep.subr.mxu0 %v1323
    %1425 = vmatpush2.msra.mxu0 %v1322
    %1426 = vmatprep.subr.mxu0 %v1321
    %1427 = vmatpush2.msra.mxu0 %v1320
    %1428 = vmatprep.mubr.f32.mxu0 %v1281
    %1429 = vmatmul.mubr.f32.gmra.mxu0 %v1280
    %v1430 = vpop.f32.mrf.mxu0
    %v1431 = vadd.f32 %v1357, %v1430
    %v1432 = vpop.f32.mrf.mxu0
    %v1433 = vadd.f32 %v1361, %v1432
    %1434 = vmatprep.mubr.f32.mxu0 %v1283
    %1435 = vmatmul.mubr.f32.gmra.mxu0 %v1282
    %v1436 = vpop.f32.mrf.mxu0
    %v1437 = vadd.f32 %v1357, %v1436
    %v1438 = vpop.f32.mrf.mxu0
    %v1439 = vadd.f32 %v1361, %v1438
    %1440 = vmatprep.mubr.f32.mxu0 %v1285
    %1441 = vmatmul.mubr.f32.gmra.mxu0 %v1284
    %v1442 = vpop.f32.mrf.mxu0
    %v1443 = vadd.f32 %v1357, %v1442
    %v1444 = vpop.f32.mrf.mxu0
    %v1445 = vadd.f32 %v1361, %v1444
    %1446 = vmatprep.mubr.f32.mxu0 %v1287
    %1447 = vmatmul.mubr.f32.gmra.mxu0 %v1286
    %v1448 = vpop.f32.mrf.mxu0
    %v1449 = vadd.f32 %v1357, %v1448
    %v1450 = vpop.f32.mrf.mxu0
    %v1451 = vadd.f32 %v1361, %v1450
    %1452 = vdwg.mxu0
    %1453 = vst [vmem:[#allocation12] sm:$0xff] %v1431
    %1454 = vst [vmem:[#allocation12 + $0x8] sm:$0xff] %v1433
    %1455 = vst [vmem:[#allocation12 + $0x10] sm:$0xff] %v1437
    %1456 = vst [vmem:[#allocation12 + $0x18] sm:$0xff] %v1439
    %1457 = vst [vmem:[#allocation12 + $0x20] sm:$0xff] %v1443
    %1458 = vst [vmem:[#allocation12 + $0x28] sm:$0xff] %v1445
    %1459 = vst [vmem:[#allocation12 + $0x30] sm:$0xff] %v1449
    %1460 = vst [vmem:[#allocation12 + $0x38] sm:$0xff] %v1451
    // Predicated region
    $region46: #{tpu_custom_call.1} parent=1 // pred_check
      _
    $region47: #{tpu_custom_call.1} parent=1 // pred_check_branch
      %1462 = sbr.rel (0) target = $region49
    $region48: #{tpu_custom_call.1} parent=1 // pred_region
      %s1464 = ssub.s32 1024, 1024
      %1465 = vsyncadd [#allocation5], %s1464
      %s1466 = sshll.u32 [#allocation12], 4
      %s1467 = int_to_ptr.vmem [resolvable:$true] %s1466
      %1472 = dma.vmem_to_hbm [thread:$0]  %s1467, 1024, %s6, [#allocation5], 256, 256, 16
    $region49: #{tpu_custom_call.1} parent=1 // pred_fallthru
      _
    // Predicated region
    $region50: #{tpu_custom_call.1} parent=1 // pred_check
      _
    $region51: #{tpu_custom_call.1} parent=1 // pred_check_branch
      %1474 = sbr.rel (0) target = $region53
    $region52: #{tpu_custom_call.1} parent=1 // pred_region
      %1475 = dma.done [#allocation5], 1024
    $region53: #{tpu_custom_call.1} parent=1 // pred_fallthru
      _
    %1476 = vsyncpa [#allocation4], 1
    %1477 = vsyncpa [#allocation7], 1
    %1478 = vsyncpa [#allocation10], 1
    %1479 = vsyncpa [#allocation5], 1

</llo_original>
